<compile_context>
chip_gen: v7x
topology: tpu7x:2x2x1
jax: 0.10.0
libtpu: 0.0.40
codegen_flags: <defaults>
</compile_context>

<pallas_src>
import numpy as np
import jax
import jax.numpy as jnp
from jax.experimental import pallas as pl
from jax.experimental.pallas import tpu as pltpu

# ------------------- small synthetic configuration ---------------------------
NUM_VAR = 3          # num_var
BATCH = 2
T_SEQ = 8            # temporal length (Conv3d depth axis, kernel = 1 there)
H_IN = 16
W_IN = 16
KSIZE = 9            # kernel_size
STRIDE = 5           # stride
OH = (H_IN - KSIZE) // STRIDE + 1
OW = (W_IN - KSIZE) // STRIDE + 1
INPUT_DIM = NUM_VAR * OH * OW     # LSTM input_dim after CNN + flatten + concat
HIDDEN = 32          # hidden_dim
NUM_LAYERS = 2       # num_lstm_layers (kernel is specialized for 2)
OUTPUT_DIM = 4       # output_dim

# derived packing constants
F_PAD = 128                       # CNN feature lanes, padded 12 -> 128
G = 4 * HIDDEN                    # gate width per layer (128)
KPAD = 2 * G                      # padded recurrent-state width (256)
VPIX = NUM_VAR * H_IN * W_IN      # flattened pixels per timestep (768)
_R_WIH1 = KPAD                    # f32-slab row of W_ih (layer 1) / fc_w
_R_BIAS = KPAD + HIDDEN           # f32-slab row of [bconv | bias1]
_ROWS_F32 = _R_BIAS + 8           # pad row count to a multiple of 8


# ----------------------------- fused kernel ----------------------------------
def fused_kernel(x_ref, wb_ref, wf_ref, out_ref, hc_ref):
    H = HIDDEN

    # ---- static, lane/sublane-tile-aligned views into the packed slabs ------
    wconv = wb_ref[0:VPIX, :]                              # (768,128) bf16
    wih0 = wb_ref[VPIX:VPIX + F_PAD, :]                    # (128,128) bf16
    whh = wf_ref[0:KPAD, :]                                # (256,256) f32 blockdiag (padded)
    wih1 = wf_ref[_R_WIH1:_R_WIH1 + H, 0:G]                # (32,128)  f32
    fcw = wf_ref[_R_WIH1:_R_WIH1 + H, G:G + OUTPUT_DIM]    # (32,4)    f32
    bconv = wf_ref[_R_BIAS:_R_BIAS + 1, 0:G]               # (1,128)
    b1 = wf_ref[_R_BIAS:_R_BIAS + 1, G:2 * G]              # (1,128)
    b0 = wf_ref[_R_BIAS + 1:_R_BIAS + 2, 0:G]              # (1,128)
    fcb = wf_ref[_R_BIAS + 1:_R_BIAS + 2, G:G + OUTPUT_DIM]  # (1,4)

    # ---- CNN (all covariates) as ONE lane-dense bf16 MXU matmul + ReLU ------
    feats = jnp.dot(x_ref[...], wconv, preferred_element_type=jnp.float32)
    feats = jnp.maximum(feats + bconv, 0.0)                # (16,128) f32

    # ---- hoisted layer-0 input->hidden projection (+ bias) ------------------
    gih0 = jnp.dot(feats.astype(jnp.bfloat16), wih0,
                   preferred_element_type=jnp.float32) + b0  # (16,128)

    # Per-lane affine turning tanh of the (host pre-scaled) gates into
    # sigmoid on the i/f/o chunks and tanh on the g chunk:
    #   act = tanh(gates) * ps + po
    lane = jax.lax.broadcasted_iota(jnp.int32, (1, G), 1)
    is_g = jnp.logical_and(lane >= 2 * H, lane < 3 * H)
    ps = jnp.where(is_g, 1.0, 0.5).astype(jnp.float32)
    po = jnp.where(is_g, 0.0, 0.5).astype(jnp.float32)

    # recurrent state scratch: h0 in lanes [0:H], h1 in lanes [G:G+H], rest 0
    hc_ref[...] = jnp.zeros((BATCH, KPAD), jnp.float32)
    c0 = jnp.zeros((BATCH, H), jnp.float32)
    c1 = jnp.zeros((BATCH, H), jnp.float32)
    h1 = jnp.zeros((BATCH, H), jnp.float32)

    # ---- fully-unrolled time loop (straight-line, T=8) -----------------------
    for t in range(T_SEQ):
        g0 = gih0[t * BATCH:(t + 1) * BATCH, :]
        if t > 0:
            # both layers' recurrent terms in ONE aligned block-diag matmul
            hh = jnp.dot(hc_ref[...], whh,
                         preferred_element_type=jnp.float32)  # (B,256)
            g0 = g0 + hh[:, 0:G]
        a0 = jnp.tanh(g0) * ps + po
        c0 = a0[:, H:2 * H] * c0 + a0[:, 0:H] * a0[:, 2 * H:3 * H]
        h0 = a0[:, 3 * H:G] * jnp.tanh(c0)

        # layer 1: the only serial in-step MXU dot
        g1 = jnp.dot(h0, wih1, preferred_element_type=jnp.float32) + b1
        if t > 0:
            g1 = g1 + hh[:, G:2 * G]
        a1 = jnp.tanh(g1) * ps + po
        c1 = a1[:, H:2 * H] * c1 + a1[:, 0:H] * a1[:, 2 * H:3 * H]
        h1 = a1[:, 3 * H:G] * jnp.tanh(c1)

        if t + 1 < T_SEQ:
            hc_ref[:, 0:H] = h0                 # lane offset 0   (aligned)
            hc_ref[:, G:G + H] = h1             # lane offset 128 (aligned)

    out_ref[...] = jnp.dot(h1, fcw, preferred_element_type=jnp.float32) + fcb


# --------------------- host-side parameter packing ----------------------------
def build_packed_params(conv_w, conv_b, layer_params, fc_w, fc_b):
    """Pack every parameter into 2 lane-dense slabs (pure NumPy, built once).

    bf16 slab (896,128): rows [0:768]   folded conv matrix (lane-padded 12->128)
                         rows [768:896] W_ih layer 0 (row-padded 12->128)
    f32  slab (296,256): rows [0:256]   padded block-diag [W_hh0 ; W_hh1]
                         rows [256:288] W_ih layer 1 | fc_w
                         row  288       conv bias    | bias layer 1
                         row  289       bias layer 0 | fc_b
    The 0.5 tanh-identity pre-scale is folded into the i/f/o gate columns.
    """
    assert NUM_LAYERS == 2
    conv_w = np.asarray(conv_w, np.float32)
    conv_b = np.asarray(conv_b, np.float32)
    (wih0, whh0, bias0), (wih1, whh1, bias1) = [
        tuple(np.asarray(a, np.float32) for a in lp) for lp in layer_params]
    fc_w = np.asarray(fc_w, np.float32)
    fc_b = np.asarray(fc_b, np.float32)
    H = HIDDEN

    gs = np.ones((1, G), np.float32)      # 0.5 on i/f/o columns, 1.0 on g
    gs[:, :2 * H] = 0.5
    gs[:, 3 * H:] = 0.5

    # folded "conv as matmul" weights + bias, lane-padded to 128 features
    wmat = np.zeros((VPIX, F_PAD), np.float32)
    bconv = np.zeros((1, F_PAD), np.float32)
    for v in range(NUM_VAR):
        for oh in range(OH):
            for ow in range(OW):
                col = v * OH * OW + oh * OW + ow
                bconv[0, col] = conv_b[0, v]
                for kh in range(KSIZE):
                    rows = (v * H_IN * W_IN + (oh * STRIDE + kh) * W_IN
                            + ow * STRIDE + np.arange(KSIZE))
                    wmat[rows, col] = conv_w[v, kh, :]

    wih0_pad = np.zeros((F_PAD, G), np.float32)
    wih0_pad[:INPUT_DIM, :] = wih0 * gs
    slab_bf16 = jnp.asarray(np.concatenate([wmat, wih0_pad], axis=0),
                            dtype=jnp.bfloat16)            # (896,128)

    slab_f32 = np.zeros((_ROWS_F32, 2 * G), np.float32)
    slab_f32[0:H, 0:G] = whh0 * gs                          # h0 lanes -> layer-0 gates
    slab_f32[G:G + H, G:2 * G] = whh1 * gs                  # h1 lanes -> layer-1 gates
    slab_f32[_R_WIH1:_R_WIH1 + H, 0:G] = wih1 * gs
    slab_f32[_R_WIH1:_R_WIH1 + H, G:G + OUTPUT_DIM] = fc_w
    slab_f32[_R_BIAS, 0:G] = bconv[0]
    slab_f32[_R_BIAS, G:2 * G] = (bias1 * gs)[0]
    slab_f32[_R_BIAS + 1, 0:G] = (bias0 * gs)[0]
    slab_f32[_R_BIAS + 1, G:G + OUTPUT_DIM] = fc_b[0]

    return slab_bf16, jnp.asarray(slab_f32)


# ------------------------------- forward --------------------------------------
@jax.jit
def cnn_lstm_forward(x, slab_bf16, slab_f32):
    # layout plumbing only: time-major rows, covariate-major flattened pixels,
    # bf16 MXU operand cast (fused by XLA with the pallas_call launch)
    xcol = jnp.transpose(x, (2, 1, 0, 3, 4)).reshape(
        T_SEQ * BATCH, VPIX).astype(jnp.bfloat16)
    return pl.pallas_call(
        fused_kernel,
        out_shape=jax.ShapeDtypeStruct((BATCH, OUTPUT_DIM), jnp.float32),
        in_specs=[pl.BlockSpec(memory_space=pltpu.MemorySpace.VMEM)] * 3,
        out_specs=pl.BlockSpec(memory_space=pltpu.MemorySpace.VMEM),
        scratch_shapes=[pltpu.VMEM((BATCH, KPAD), jnp.float32)],
    )(xcol, slab_bf16, slab_f32)


# ----------------------------- deterministic init -----------------------------
def init_params(key):
    ks = jax.random.split(key, 3 + 3 * NUM_LAYERS + 2)
    conv_w = jax.random.normal(ks[0], (NUM_VAR, KSIZE, KSIZE), jnp.float32) * 0.1
    conv_b = jax.random.normal(ks[1], (1, NUM_VAR), jnp.float32) * 0.1
    layer_params = []
    kidx = 2
    in_dim = INPUT_DIM
    for _ in range(NUM_LAYERS):
        w_ih = jax.random.normal(ks[kidx], (in_dim, 4 * HIDDEN),
                                 jnp.float32) * (1.0 / float(in_dim) ** 0.5)
        w_hh = jax.random.normal(ks[kidx + 1], (HIDDEN, 4 * HIDDEN),
                                 jnp.float32) * (1.0 / float(HIDDEN) ** 0.5)
        bias = jax.random.normal(ks[kidx + 2], (1, 4 * HIDDEN), jnp.float32) * 0.1
        layer_params.append((w_ih, w_hh, bias))
        kidx += 3
        in_dim = HIDDEN
    fc_w = jax.random.normal(ks[kidx], (HIDDEN, OUTPUT_DIM), jnp.float32) * 0.1
    fc_b = jax.random.normal(ks[kidx + 1], (1, OUTPUT_DIM), jnp.float32) * 0.1
    return conv_w, conv_b, layer_params, fc_w, fc_b


# ------------------------------ pure-JAX reference -----------------------------
def ref_forward(x, conv_w, conv_b, layer_params, fc_w, fc_b):
    feats = []
    for v in range(NUM_VAR):
        xv = x[v].reshape(BATCH * T_SEQ, 1, H_IN, W_IN)
        wv = conv_w[v].reshape(1, 1, KSIZE, KSIZE)
        yv = jax.lax.conv_general_dilated(
            xv, wv, (STRIDE, STRIDE), "VALID",
            dimension_numbers=("NCHW", "OIHW", "NCHW"))
        yv = jnp.maximum(yv + conv_b[0, v], 0.0)
        feats.append(yv.reshape(BATCH, T_SEQ, OH * OW))
    xf = jnp.concatenate(feats, axis=-1)

    h = [jnp.zeros((BATCH, HIDDEN), jnp.float32) for _ in range(NUM_LAYERS)]
    c = [jnp.zeros((BATCH, HIDDEN), jnp.float32) for _ in range(NUM_LAYERS)]
    for t in range(T_SEQ):
        inp = xf[:, t, :]
        for l, (w_ih, w_hh, bias) in enumerate(layer_params):
            gates = inp @ w_ih + h[l] @ w_hh + bias
            i_g = jax.nn.sigmoid(gates[:, 0:HIDDEN])
            f_g = jax.nn.sigmoid(gates[:, HIDDEN:2 * HIDDEN])
            g_g = jnp.tanh(gates[:, 2 * HIDDEN:3 * HIDDEN])
            o_g = jax.nn.sigmoid(gates[:, 3 * HIDDEN:4 * HIDDEN])
            c[l] = f_g * c[l] + i_g * g_g
            h[l] = o_g * jnp.tanh(c[l])
            inp = h[l]
    return inp @ fc_w + fc_b


# ----------------------------------- main --------------------------------------
if __name__ == "__main__":
    key = jax.random.PRNGKey(0)
    k_x, k_p = jax.random.split(key)
    x = jax.random.normal(k_x, (NUM_VAR, BATCH, T_SEQ, H_IN, W_IN), jnp.float32)
    conv_w, conv_b, layer_params, fc_w, fc_b = init_params(k_p)

    # packed parameter slabs are built once (pure NumPy) and reused every call
    slab_bf16, slab_f32 = build_packed_params(conv_w, conv_b, layer_params,
                                              fc_w, fc_b)

    out = cnn_lstm_forward(x, slab_bf16, slab_f32)
    out = jax.block_until_ready(out)

    ref = jax.block_until_ready(
        ref_forward(x, conv_w, conv_b, layer_params, fc_w, fc_b))
    assert out.shape == (BATCH, OUTPUT_DIM)
    # tolerance covers the bf16 cast of the two feed-forward matmul operands;
    # the recurrence and all gate math are exact f32 (sigmoid is the exact
    # tanh identity, no approximate reciprocal anymore).
    assert jnp.allclose(out, ref, atol=2e-2, rtol=2e-2), (out, ref)
    print("KERNEL_OK")
</pallas_src>

<mosaic_0001>
module attributes {stable_mosaic.version = 11 : i64} {
  func.func @fused_kernel(%arg0: memref<16x768xbf16, #tpu.memory_space<vmem>>, %arg1: memref<896x128xbf16, #tpu.memory_space<vmem>>, %arg2: memref<296x256xf32, #tpu.memory_space<vmem>>, %arg3: memref<2x4xf32, #tpu.memory_space<vmem>>, %arg4: memref<2x256xf32, #tpu.memory_space<vmem>>) attributes {dimension_semantics = [], scalar_prefetch = 0 : i64, scratch_operands = 1 : i64, tpu.core_type = #tpu.core_type<tc>} {
    %c0 = arith.constant 0 : index
    %c0_0 = arith.constant 0 : index
    %0 = vector.load %arg1[%c0, %c0_0] : memref<896x128xbf16, #tpu.memory_space<vmem>>, vector<768x128xbf16>
    %c768 = arith.constant 768 : index
    %c0_1 = arith.constant 0 : index
    %1 = vector.load %arg1[%c768, %c0_1] : memref<896x128xbf16, #tpu.memory_space<vmem>>, vector<128x128xbf16>
    %c0_2 = arith.constant 0 : index
    %c0_3 = arith.constant 0 : index
    %2 = vector.load %arg2[%c0_2, %c0_3] : memref<296x256xf32, #tpu.memory_space<vmem>>, vector<256x256xf32>
    %c256 = arith.constant 256 : index
    %c0_4 = arith.constant 0 : index
    %3 = vector.load %arg2[%c256, %c0_4] : memref<296x256xf32, #tpu.memory_space<vmem>>, vector<32x128xf32>
    %c256_5 = arith.constant 256 : index
    %c128 = arith.constant 128 : index
    %4 = vector.load %arg2[%c256_5, %c128] : memref<296x256xf32, #tpu.memory_space<vmem>>, vector<32x4xf32>
    %c288 = arith.constant 288 : index
    %c0_6 = arith.constant 0 : index
    %5 = vector.load %arg2[%c288, %c0_6] : memref<296x256xf32, #tpu.memory_space<vmem>>, vector<1x128xf32>
    %c288_7 = arith.constant 288 : index
    %c128_8 = arith.constant 128 : index
    %6 = vector.load %arg2[%c288_7, %c128_8] : memref<296x256xf32, #tpu.memory_space<vmem>>, vector<1x128xf32>
    %c289 = arith.constant 289 : index
    %c0_9 = arith.constant 0 : index
    %7 = vector.load %arg2[%c289, %c0_9] : memref<296x256xf32, #tpu.memory_space<vmem>>, vector<1x128xf32>
    %c289_10 = arith.constant 289 : index
    %c128_11 = arith.constant 128 : index
    %8 = vector.load %arg2[%c289_10, %c128_11] : memref<296x256xf32, #tpu.memory_space<vmem>>, vector<1x4xf32>
    %c0_12 = arith.constant 0 : index
    %c0_13 = arith.constant 0 : index
    %9 = vector.load %arg0[%c0_12, %c0_13] : memref<16x768xbf16, #tpu.memory_space<vmem>>, vector<16x768xbf16>
    %cst = arith.constant dense<0.000000e+00> : vector<16x128xf32>
    %10 = tpu.matmul %9, %0, %cst {dimension_numbers = #tpu.dot_dimension_numbers<[1], [0], [0], [1], [0, 0, 1, 1], [], []>} : vector<16x768xbf16>, vector<768x128xbf16>, vector<16x128xf32> -> vector<16x128xf32>
    %11 = vector.broadcast %5 : vector<1x128xf32> to vector<16x128xf32>
    %12 = arith.addf %10, %11 : vector<16x128xf32>
    %cst_14 = arith.constant 0.000000e+00 : f32
    %13 = vector.broadcast %cst_14 : f32 to vector<16x128xf32>
    %14 = arith.maximumf %12, %13 : vector<16x128xf32>
    %15 = arith.truncf %14 : vector<16x128xf32> to vector<16x128xbf16>
    %cst_15 = arith.constant dense<0.000000e+00> : vector<16x128xf32>
    %16 = tpu.matmul %15, %1, %cst_15 {dimension_numbers = #tpu.dot_dimension_numbers<[1], [0], [0], [1], [0, 0, 1, 1], [], []>} : vector<16x128xbf16>, vector<128x128xbf16>, vector<16x128xf32> -> vector<16x128xf32>
    %17 = vector.broadcast %7 : vector<1x128xf32> to vector<16x128xf32>
    %18 = arith.addf %16, %17 : vector<16x128xf32>
    %19 = tpu.iota {dimensions = array<i32: 1>} : vector<1x128xi32>
    %c64_i32 = arith.constant 64 : i32
    %20 = vector.broadcast %c64_i32 : i32 to vector<1x128xi32>
    %21 = arith.cmpi sge, %19, %20 : vector<1x128xi32>
    %c96_i32 = arith.constant 96 : i32
    %22 = vector.broadcast %c96_i32 : i32 to vector<1x128xi32>
    %23 = arith.cmpi slt, %19, %22 : vector<1x128xi32>
    %24 = arith.andi %21, %23 : vector<1x128xi1>
    %cst_16 = arith.constant 1.000000e+00 : f32
    %cst_17 = arith.constant 5.000000e-01 : f32
    %25 = vector.broadcast %cst_16 : f32 to vector<1x128xf32>
    %26 = vector.broadcast %cst_17 : f32 to vector<1x128xf32>
    %27 = arith.select %24, %25, %26 : vector<1x128xi1>, vector<1x128xf32>
    %cst_18 = arith.constant 0.000000e+00 : f32
    %cst_19 = arith.constant 5.000000e-01 : f32
    %28 = vector.broadcast %cst_18 : f32 to vector<1x128xf32>
    %29 = vector.broadcast %cst_19 : f32 to vector<1x128xf32>
    %30 = arith.select %24, %28, %29 : vector<1x128xi1>, vector<1x128xf32>
    %cst_20 = arith.constant 0.000000e+00 : f32
    %31 = vector.broadcast %cst_20 : f32 to vector<2x256xf32>
    %c0_21 = arith.constant 0 : index
    %c0_22 = arith.constant 0 : index
    %32 = vector.load %arg4[%c0_21, %c0_22] : memref<2x256xf32, #tpu.memory_space<vmem>>, vector<2x256xf32>
    tpu.vector_store %arg4[%c0_21, %c0_22], %31 {strides = array<i32>} : memref<2x256xf32, #tpu.memory_space<vmem>>, vector<2x256xf32>,
    %cst_23 = arith.constant 0.000000e+00 : f32
    %33 = vector.broadcast %cst_23 : f32 to vector<2x32xf32>
    %cst_24 = arith.constant 0.000000e+00 : f32
    %34 = vector.broadcast %cst_24 : f32 to vector<2x32xf32>
    %35 = vector.extract_strided_slice %18 {offsets = [0, 0], sizes = [2, 128], strides = [1, 1]} : vector<16x128xf32> to vector<2x128xf32>
    %36 = math.tanh %35 : vector<2x128xf32>
    %37 = vector.broadcast %27 : vector<1x128xf32> to vector<2x128xf32>
    %38 = arith.mulf %36, %37 : vector<2x128xf32>
    %39 = vector.broadcast %30 : vector<1x128xf32> to vector<2x128xf32>
    %40 = arith.addf %38, %39 : vector<2x128xf32>
    %41 = vector.extract_strided_slice %40 {offsets = [0, 32], sizes = [2, 32], strides = [1, 1]} : vector<2x128xf32> to vector<2x32xf32>
    %42 = arith.mulf %41, %33 : vector<2x32xf32>
    %43 = vector.extract_strided_slice %40 {offsets = [0, 0], sizes = [2, 32], strides = [1, 1]} : vector<2x128xf32> to vector<2x32xf32>
    %44 = vector.extract_strided_slice %40 {offsets = [0, 64], sizes = [2, 32], strides = [1, 1]} : vector<2x128xf32> to vector<2x32xf32>
    %45 = arith.mulf %43, %44 : vector<2x32xf32>
    %46 = arith.addf %42, %45 : vector<2x32xf32>
    %47 = vector.extract_strided_slice %40 {offsets = [0, 96], sizes = [2, 32], strides = [1, 1]} : vector<2x128xf32> to vector<2x32xf32>
    %48 = math.tanh %46 : vector<2x32xf32>
    %49 = arith.mulf %47, %48 : vector<2x32xf32>
    %cst_25 = arith.constant dense<0.000000e+00> : vector<2x128xf32>
    %50 = tpu.matmul %49, %3, %cst_25 {dimension_numbers = #tpu.dot_dimension_numbers<[1], [0], [0], [1], [0, 0, 1, 1], [], []>} : vector<2x32xf32>, vector<32x128xf32>, vector<2x128xf32> -> vector<2x128xf32>
    %51 = vector.broadcast %6 : vector<1x128xf32> to vector<2x128xf32>
    %52 = arith.addf %50, %51 : vector<2x128xf32>
    %53 = math.tanh %52 : vector<2x128xf32>
    %54 = vector.broadcast %27 : vector<1x128xf32> to vector<2x128xf32>
    %55 = arith.mulf %53, %54 : vector<2x128xf32>
    %56 = vector.broadcast %30 : vector<1x128xf32> to vector<2x128xf32>
    %57 = arith.addf %55, %56 : vector<2x128xf32>
    %58 = vector.extract_strided_slice %57 {offsets = [0, 32], sizes = [2, 32], strides = [1, 1]} : vector<2x128xf32> to vector<2x32xf32>
    %59 = arith.mulf %58, %34 : vector<2x32xf32>
    %60 = vector.extract_strided_slice %57 {offsets = [0, 0], sizes = [2, 32], strides = [1, 1]} : vector<2x128xf32> to vector<2x32xf32>
    %61 = vector.extract_strided_slice %57 {offsets = [0, 64], sizes = [2, 32], strides = [1, 1]} : vector<2x128xf32> to vector<2x32xf32>
    %62 = arith.mulf %60, %61 : vector<2x32xf32>
    %63 = arith.addf %59, %62 : vector<2x32xf32>
    %64 = vector.extract_strided_slice %57 {offsets = [0, 96], sizes = [2, 32], strides = [1, 1]} : vector<2x128xf32> to vector<2x32xf32>
    %65 = math.tanh %63 : vector<2x32xf32>
    %66 = arith.mulf %64, %65 : vector<2x32xf32>
    %c0_26 = arith.constant 0 : index
    %c0_27 = arith.constant 0 : index
    %67 = vector.load %arg4[%c0_26, %c0_27] : memref<2x256xf32, #tpu.memory_space<vmem>>, vector<2x32xf32>
    tpu.vector_store %arg4[%c0_26, %c0_27], %49 {strides = array<i32>} : memref<2x256xf32, #tpu.memory_space<vmem>>, vector<2x32xf32>,
    %c0_28 = arith.constant 0 : index
    %c128_29 = arith.constant 128 : index
    %68 = vector.load %arg4[%c0_28, %c128_29] : memref<2x256xf32, #tpu.memory_space<vmem>>, vector<2x32xf32>
    tpu.vector_store %arg4[%c0_28, %c128_29], %66 {strides = array<i32>} : memref<2x256xf32, #tpu.memory_space<vmem>>, vector<2x32xf32>,
    %69 = vector.extract_strided_slice %18 {offsets = [2, 0], sizes = [2, 128], strides = [1, 1]} : vector<16x128xf32> to vector<2x128xf32>
    %c0_30 = arith.constant 0 : index
    %c0_31 = arith.constant 0 : index
    %70 = vector.load %arg4[%c0_30, %c0_31] : memref<2x256xf32, #tpu.memory_space<vmem>>, vector<2x256xf32>
    %cst_32 = arith.constant dense<0.000000e+00> : vector<2x256xf32>
    %71 = tpu.matmul %70, %2, %cst_32 {dimension_numbers = #tpu.dot_dimension_numbers<[1], [0], [0], [1], [0, 0, 1, 1], [], []>} : vector<2x256xf32>, vector<256x256xf32>, vector<2x256xf32> -> vector<2x256xf32>
    %72 = vector.extract_strided_slice %71 {offsets = [0, 0], sizes = [2, 128], strides = [1, 1]} : vector<2x256xf32> to vector<2x128xf32>
    %73 = arith.addf %69, %72 : vector<2x128xf32>
    %74 = math.tanh %73 : vector<2x128xf32>
    %75 = vector.broadcast %27 : vector<1x128xf32> to vector<2x128xf32>
    %76 = arith.mulf %74, %75 : vector<2x128xf32>
    %77 = vector.broadcast %30 : vector<1x128xf32> to vector<2x128xf32>
    %78 = arith.addf %76, %77 : vector<2x128xf32>
    %79 = vector.extract_strided_slice %78 {offsets = [0, 32], sizes = [2, 32], strides = [1, 1]} : vector<2x128xf32> to vector<2x32xf32>
    %80 = arith.mulf %79, %46 : vector<2x32xf32>
    %81 = vector.extract_strided_slice %78 {offsets = [0, 0], sizes = [2, 32], strides = [1, 1]} : vector<2x128xf32> to vector<2x32xf32>
    %82 = vector.extract_strided_slice %78 {offsets = [0, 64], sizes = [2, 32], strides = [1, 1]} : vector<2x128xf32> to vector<2x32xf32>
    %83 = arith.mulf %81, %82 : vector<2x32xf32>
    %84 = arith.addf %80, %83 : vector<2x32xf32>
    %85 = vector.extract_strided_slice %78 {offsets = [0, 96], sizes = [2, 32], strides = [1, 1]} : vector<2x128xf32> to vector<2x32xf32>
    %86 = math.tanh %84 : vector<2x32xf32>
    %87 = arith.mulf %85, %86 : vector<2x32xf32>
    %cst_33 = arith.constant dense<0.000000e+00> : vector<2x128xf32>
    %88 = tpu.matmul %87, %3, %cst_33 {dimension_numbers = #tpu.dot_dimension_numbers<[1], [0], [0], [1], [0, 0, 1, 1], [], []>} : vector<2x32xf32>, vector<32x128xf32>, vector<2x128xf32> -> vector<2x128xf32>
    %89 = vector.broadcast %6 : vector<1x128xf32> to vector<2x128xf32>
    %90 = arith.addf %88, %89 : vector<2x128xf32>
    %91 = vector.extract_strided_slice %71 {offsets = [0, 128], sizes = [2, 128], strides = [1, 1]} : vector<2x256xf32> to vector<2x128xf32>
    %92 = arith.addf %90, %91 : vector<2x128xf32>
    %93 = math.tanh %92 : vector<2x128xf32>
    %94 = vector.broadcast %27 : vector<1x128xf32> to vector<2x128xf32>
    %95 = arith.mulf %93, %94 : vector<2x128xf32>
    %96 = vector.broadcast %30 : vector<1x128xf32> to vector<2x128xf32>
    %97 = arith.addf %95, %96 : vector<2x128xf32>
    %98 = vector.extract_strided_slice %97 {offsets = [0, 32], sizes = [2, 32], strides = [1, 1]} : vector<2x128xf32> to vector<2x32xf32>
    %99 = arith.mulf %98, %63 : vector<2x32xf32>
    %100 = vector.extract_strided_slice %97 {offsets = [0, 0], sizes = [2, 32], strides = [1, 1]} : vector<2x128xf32> to vector<2x32xf32>
    %101 = vector.extract_strided_slice %97 {offsets = [0, 64], sizes = [2, 32], strides = [1, 1]} : vector<2x128xf32> to vector<2x32xf32>
    %102 = arith.mulf %100, %101 : vector<2x32xf32>
    %103 = arith.addf %99, %102 : vector<2x32xf32>
    %104 = vector.extract_strided_slice %97 {offsets = [0, 96], sizes = [2, 32], strides = [1, 1]} : vector<2x128xf32> to vector<2x32xf32>
    %105 = math.tanh %103 : vector<2x32xf32>
    %106 = arith.mulf %104, %105 : vector<2x32xf32>
    %c0_34 = arith.constant 0 : index
    %c0_35 = arith.constant 0 : index
    %107 = vector.load %arg4[%c0_34, %c0_35] : memref<2x256xf32, #tpu.memory_space<vmem>>, vector<2x32xf32>
    tpu.vector_store %arg4[%c0_34, %c0_35], %87 {strides = array<i32>} : memref<2x256xf32, #tpu.memory_space<vmem>>, vector<2x32xf32>,
    %c0_36 = arith.constant 0 : index
    %c128_37 = arith.constant 128 : index
    %108 = vector.load %arg4[%c0_36, %c128_37] : memref<2x256xf32, #tpu.memory_space<vmem>>, vector<2x32xf32>
    tpu.vector_store %arg4[%c0_36, %c128_37], %106 {strides = array<i32>} : memref<2x256xf32, #tpu.memory_space<vmem>>, vector<2x32xf32>,
    %109 = vector.extract_strided_slice %18 {offsets = [4, 0], sizes = [2, 128], strides = [1, 1]} : vector<16x128xf32> to vector<2x128xf32>
    %c0_38 = arith.constant 0 : index
    %c0_39 = arith.constant 0 : index
    %110 = vector.load %arg4[%c0_38, %c0_39] : memref<2x256xf32, #tpu.memory_space<vmem>>, vector<2x256xf32>
    %cst_40 = arith.constant dense<0.000000e+00> : vector<2x256xf32>
    %111 = tpu.matmul %110, %2, %cst_40 {dimension_numbers = #tpu.dot_dimension_numbers<[1], [0], [0], [1], [0, 0, 1, 1], [], []>} : vector<2x256xf32>, vector<256x256xf32>, vector<2x256xf32> -> vector<2x256xf32>
    %112 = vector.extract_strided_slice %111 {offsets = [0, 0], sizes = [2, 128], strides = [1, 1]} : vector<2x256xf32> to vector<2x128xf32>
    %113 = arith.addf %109, %112 : vector<2x128xf32>
    %114 = math.tanh %113 : vector<2x128xf32>
    %115 = vector.broadcast %27 : vector<1x128xf32> to vector<2x128xf32>
    %116 = arith.mulf %114, %115 : vector<2x128xf32>
    %117 = vector.broadcast %30 : vector<1x128xf32> to vector<2x128xf32>
    %118 = arith.addf %116, %117 : vector<2x128xf32>
    %119 = vector.extract_strided_slice %118 {offsets = [0, 32], sizes = [2, 32], strides = [1, 1]} : vector<2x128xf32> to vector<2x32xf32>
    %120 = arith.mulf %119, %84 : vector<2x32xf32>
    %121 = vector.extract_strided_slice %118 {offsets = [0, 0], sizes = [2, 32], strides = [1, 1]} : vector<2x128xf32> to vector<2x32xf32>
    %122 = vector.extract_strided_slice %118 {offsets = [0, 64], sizes = [2, 32], strides = [1, 1]} : vector<2x128xf32> to vector<2x32xf32>
    %123 = arith.mulf %121, %122 : vector<2x32xf32>
    %124 = arith.addf %120, %123 : vector<2x32xf32>
    %125 = vector.extract_strided_slice %118 {offsets = [0, 96], sizes = [2, 32], strides = [1, 1]} : vector<2x128xf32> to vector<2x32xf32>
    %126 = math.tanh %124 : vector<2x32xf32>
    %127 = arith.mulf %125, %126 : vector<2x32xf32>
    %cst_41 = arith.constant dense<0.000000e+00> : vector<2x128xf32>
    %128 = tpu.matmul %127, %3, %cst_41 {dimension_numbers = #tpu.dot_dimension_numbers<[1], [0], [0], [1], [0, 0, 1, 1], [], []>} : vector<2x32xf32>, vector<32x128xf32>, vector<2x128xf32> -> vector<2x128xf32>
    %129 = vector.broadcast %6 : vector<1x128xf32> to vector<2x128xf32>
    %130 = arith.addf %128, %129 : vector<2x128xf32>
    %131 = vector.extract_strided_slice %111 {offsets = [0, 128], sizes = [2, 128], strides = [1, 1]} : vector<2x256xf32> to vector<2x128xf32>
    %132 = arith.addf %130, %131 : vector<2x128xf32>
    %133 = math.tanh %132 : vector<2x128xf32>
    %134 = vector.broadcast %27 : vector<1x128xf32> to vector<2x128xf32>
    %135 = arith.mulf %133, %134 : vector<2x128xf32>
    %136 = vector.broadcast %30 : vector<1x128xf32> to vector<2x128xf32>
    %137 = arith.addf %135, %136 : vector<2x128xf32>
    %138 = vector.extract_strided_slice %137 {offsets = [0, 32], sizes = [2, 32], strides = [1, 1]} : vector<2x128xf32> to vector<2x32xf32>
    %139 = arith.mulf %138, %103 : vector<2x32xf32>
    %140 = vector.extract_strided_slice %137 {offsets = [0, 0], sizes = [2, 32], strides = [1, 1]} : vector<2x128xf32> to vector<2x32xf32>
    %141 = vector.extract_strided_slice %137 {offsets = [0, 64], sizes = [2, 32], strides = [1, 1]} : vector<2x128xf32> to vector<2x32xf32>
    %142 = arith.mulf %140, %141 : vector<2x32xf32>
    %143 = arith.addf %139, %142 : vector<2x32xf32>
    %144 = vector.extract_strided_slice %137 {offsets = [0, 96], sizes = [2, 32], strides = [1, 1]} : vector<2x128xf32> to vector<2x32xf32>
    %145 = math.tanh %143 : vector<2x32xf32>
    %146 = arith.mulf %144, %145 : vector<2x32xf32>
    %c0_42 = arith.constant 0 : index
    %c0_43 = arith.constant 0 : index
    %147 = vector.load %arg4[%c0_42, %c0_43] : memref<2x256xf32, #tpu.memory_space<vmem>>, vector<2x32xf32>
    tpu.vector_store %arg4[%c0_42, %c0_43], %127 {strides = array<i32>} : memref<2x256xf32, #tpu.memory_space<vmem>>, vector<2x32xf32>,
    %c0_44 = arith.constant 0 : index
    %c128_45 = arith.constant 128 : index
    %148 = vector.load %arg4[%c0_44, %c128_45] : memref<2x256xf32, #tpu.memory_space<vmem>>, vector<2x32xf32>
    tpu.vector_store %arg4[%c0_44, %c128_45], %146 {strides = array<i32>} : memref<2x256xf32, #tpu.memory_space<vmem>>, vector<2x32xf32>,
    %149 = vector.extract_strided_slice %18 {offsets = [6, 0], sizes = [2, 128], strides = [1, 1]} : vector<16x128xf32> to vector<2x128xf32>
    %c0_46 = arith.constant 0 : index
    %c0_47 = arith.constant 0 : index
    %150 = vector.load %arg4[%c0_46, %c0_47] : memref<2x256xf32, #tpu.memory_space<vmem>>, vector<2x256xf32>
    %cst_48 = arith.constant dense<0.000000e+00> : vector<2x256xf32>
    %151 = tpu.matmul %150, %2, %cst_48 {dimension_numbers = #tpu.dot_dimension_numbers<[1], [0], [0], [1], [0, 0, 1, 1], [], []>} : vector<2x256xf32>, vector<256x256xf32>, vector<2x256xf32> -> vector<2x256xf32>
    %152 = vector.extract_strided_slice %151 {offsets = [0, 0], sizes = [2, 128], strides = [1, 1]} : vector<2x256xf32> to vector<2x128xf32>
    %153 = arith.addf %149, %152 : vector<2x128xf32>
    %154 = math.tanh %153 : vector<2x128xf32>
    %155 = vector.broadcast %27 : vector<1x128xf32> to vector<2x128xf32>
    %156 = arith.mulf %154, %155 : vector<2x128xf32>
    %157 = vector.broadcast %30 : vector<1x128xf32> to vector<2x128xf32>
    %158 = arith.addf %156, %157 : vector<2x128xf32>
    %159 = vector.extract_strided_slice %158 {offsets = [0, 32], sizes = [2, 32], strides = [1, 1]} : vector<2x128xf32> to vector<2x32xf32>
    %160 = arith.mulf %159, %124 : vector<2x32xf32>
    %161 = vector.extract_strided_slice %158 {offsets = [0, 0], sizes = [2, 32], strides = [1, 1]} : vector<2x128xf32> to vector<2x32xf32>
    %162 = vector.extract_strided_slice %158 {offsets = [0, 64], sizes = [2, 32], strides = [1, 1]} : vector<2x128xf32> to vector<2x32xf32>
    %163 = arith.mulf %161, %162 : vector<2x32xf32>
    %164 = arith.addf %160, %163 : vector<2x32xf32>
    %165 = vector.extract_strided_slice %158 {offsets = [0, 96], sizes = [2, 32], strides = [1, 1]} : vector<2x128xf32> to vector<2x32xf32>
    %166 = math.tanh %164 : vector<2x32xf32>
    %167 = arith.mulf %165, %166 : vector<2x32xf32>
    %cst_49 = arith.constant dense<0.000000e+00> : vector<2x128xf32>
    %168 = tpu.matmul %167, %3, %cst_49 {dimension_numbers = #tpu.dot_dimension_numbers<[1], [0], [0], [1], [0, 0, 1, 1], [], []>} : vector<2x32xf32>, vector<32x128xf32>, vector<2x128xf32> -> vector<2x128xf32>
    %169 = vector.broadcast %6 : vector<1x128xf32> to vector<2x128xf32>
    %170 = arith.addf %168, %169 : vector<2x128xf32>
    %171 = vector.extract_strided_slice %151 {offsets = [0, 128], sizes = [2, 128], strides = [1, 1]} : vector<2x256xf32> to vector<2x128xf32>
    %172 = arith.addf %170, %171 : vector<2x128xf32>
    %173 = math.tanh %172 : vector<2x128xf32>
    %174 = vector.broadcast %27 : vector<1x128xf32> to vector<2x128xf32>
    %175 = arith.mulf %173, %174 : vector<2x128xf32>
    %176 = vector.broadcast %30 : vector<1x128xf32> to vector<2x128xf32>
    %177 = arith.addf %175, %176 : vector<2x128xf32>
    %178 = vector.extract_strided_slice %177 {offsets = [0, 32], sizes = [2, 32], strides = [1, 1]} : vector<2x128xf32> to vector<2x32xf32>
    %179 = arith.mulf %178, %143 : vector<2x32xf32>
    %180 = vector.extract_strided_slice %177 {offsets = [0, 0], sizes = [2, 32], strides = [1, 1]} : vector<2x128xf32> to vector<2x32xf32>
    %181 = vector.extract_strided_slice %177 {offsets = [0, 64], sizes = [2, 32], strides = [1, 1]} : vector<2x128xf32> to vector<2x32xf32>
    %182 = arith.mulf %180, %181 : vector<2x32xf32>
    %183 = arith.addf %179, %182 : vector<2x32xf32>
    %184 = vector.extract_strided_slice %177 {offsets = [0, 96], sizes = [2, 32], strides = [1, 1]} : vector<2x128xf32> to vector<2x32xf32>
    %185 = math.tanh %183 : vector<2x32xf32>
    %186 = arith.mulf %184, %185 : vector<2x32xf32>
    %c0_50 = arith.constant 0 : index
    %c0_51 = arith.constant 0 : index
    %187 = vector.load %arg4[%c0_50, %c0_51] : memref<2x256xf32, #tpu.memory_space<vmem>>, vector<2x32xf32>
    tpu.vector_store %arg4[%c0_50, %c0_51], %167 {strides = array<i32>} : memref<2x256xf32, #tpu.memory_space<vmem>>, vector<2x32xf32>,
    %c0_52 = arith.constant 0 : index
    %c128_53 = arith.constant 128 : index
    %188 = vector.load %arg4[%c0_52, %c128_53] : memref<2x256xf32, #tpu.memory_space<vmem>>, vector<2x32xf32>
    tpu.vector_store %arg4[%c0_52, %c128_53], %186 {strides = array<i32>} : memref<2x256xf32, #tpu.memory_space<vmem>>, vector<2x32xf32>,
    %189 = vector.extract_strided_slice %18 {offsets = [8, 0], sizes = [2, 128], strides = [1, 1]} : vector<16x128xf32> to vector<2x128xf32>
    %c0_54 = arith.constant 0 : index
    %c0_55 = arith.constant 0 : index
    %190 = vector.load %arg4[%c0_54, %c0_55] : memref<2x256xf32, #tpu.memory_space<vmem>>, vector<2x256xf32>
    %cst_56 = arith.constant dense<0.000000e+00> : vector<2x256xf32>
    %191 = tpu.matmul %190, %2, %cst_56 {dimension_numbers = #tpu.dot_dimension_numbers<[1], [0], [0], [1], [0, 0, 1, 1], [], []>} : vector<2x256xf32>, vector<256x256xf32>, vector<2x256xf32> -> vector<2x256xf32>
    %192 = vector.extract_strided_slice %191 {offsets = [0, 0], sizes = [2, 128], strides = [1, 1]} : vector<2x256xf32> to vector<2x128xf32>
    %193 = arith.addf %189, %192 : vector<2x128xf32>
    %194 = math.tanh %193 : vector<2x128xf32>
    %195 = vector.broadcast %27 : vector<1x128xf32> to vector<2x128xf32>
    %196 = arith.mulf %194, %195 : vector<2x128xf32>
    %197 = vector.broadcast %30 : vector<1x128xf32> to vector<2x128xf32>
    %198 = arith.addf %196, %197 : vector<2x128xf32>
    %199 = vector.extract_strided_slice %198 {offsets = [0, 32], sizes = [2, 32], strides = [1, 1]} : vector<2x128xf32> to vector<2x32xf32>
    %200 = arith.mulf %199, %164 : vector<2x32xf32>
    %201 = vector.extract_strided_slice %198 {offsets = [0, 0], sizes = [2, 32], strides = [1, 1]} : vector<2x128xf32> to vector<2x32xf32>
    %202 = vector.extract_strided_slice %198 {offsets = [0, 64], sizes = [2, 32], strides = [1, 1]} : vector<2x128xf32> to vector<2x32xf32>
    %203 = arith.mulf %201, %202 : vector<2x32xf32>
    %204 = arith.addf %200, %203 : vector<2x32xf32>
    %205 = vector.extract_strided_slice %198 {offsets = [0, 96], sizes = [2, 32], strides = [1, 1]} : vector<2x128xf32> to vector<2x32xf32>
    %206 = math.tanh %204 : vector<2x32xf32>
    %207 = arith.mulf %205, %206 : vector<2x32xf32>
    %cst_57 = arith.constant dense<0.000000e+00> : vector<2x128xf32>
    %208 = tpu.matmul %207, %3, %cst_57 {dimension_numbers = #tpu.dot_dimension_numbers<[1], [0], [0], [1], [0, 0, 1, 1], [], []>} : vector<2x32xf32>, vector<32x128xf32>, vector<2x128xf32> -> vector<2x128xf32>
    %209 = vector.broadcast %6 : vector<1x128xf32> to vector<2x128xf32>
    %210 = arith.addf %208, %209 : vector<2x128xf32>
    %211 = vector.extract_strided_slice %191 {offsets = [0, 128], sizes = [2, 128], strides = [1, 1]} : vector<2x256xf32> to vector<2x128xf32>
    %212 = arith.addf %210, %211 : vector<2x128xf32>
    %213 = math.tanh %212 : vector<2x128xf32>
    %214 = vector.broadcast %27 : vector<1x128xf32> to vector<2x128xf32>
    %215 = arith.mulf %213, %214 : vector<2x128xf32>
    %216 = vector.broadcast %30 : vector<1x128xf32> to vector<2x128xf32>
    %217 = arith.addf %215, %216 : vector<2x128xf32>
    %218 = vector.extract_strided_slice %217 {offsets = [0, 32], sizes = [2, 32], strides = [1, 1]} : vector<2x128xf32> to vector<2x32xf32>
    %219 = arith.mulf %218, %183 : vector<2x32xf32>
    %220 = vector.extract_strided_slice %217 {offsets = [0, 0], sizes = [2, 32], strides = [1, 1]} : vector<2x128xf32> to vector<2x32xf32>
    %221 = vector.extract_strided_slice %217 {offsets = [0, 64], sizes = [2, 32], strides = [1, 1]} : vector<2x128xf32> to vector<2x32xf32>
    %222 = arith.mulf %220, %221 : vector<2x32xf32>
    %223 = arith.addf %219, %222 : vector<2x32xf32>
    %224 = vector.extract_strided_slice %217 {offsets = [0, 96], sizes = [2, 32], strides = [1, 1]} : vector<2x128xf32> to vector<2x32xf32>
    %225 = math.tanh %223 : vector<2x32xf32>
    %226 = arith.mulf %224, %225 : vector<2x32xf32>
    %c0_58 = arith.constant 0 : index
    %c0_59 = arith.constant 0 : index
    %227 = vector.load %arg4[%c0_58, %c0_59] : memref<2x256xf32, #tpu.memory_space<vmem>>, vector<2x32xf32>
    tpu.vector_store %arg4[%c0_58, %c0_59], %207 {strides = array<i32>} : memref<2x256xf32, #tpu.memory_space<vmem>>, vector<2x32xf32>,
    %c0_60 = arith.constant 0 : index
    %c128_61 = arith.constant 128 : index
    %228 = vector.load %arg4[%c0_60, %c128_61] : memref<2x256xf32, #tpu.memory_space<vmem>>, vector<2x32xf32>
    tpu.vector_store %arg4[%c0_60, %c128_61], %226 {strides = array<i32>} : memref<2x256xf32, #tpu.memory_space<vmem>>, vector<2x32xf32>,
    %229 = vector.extract_strided_slice %18 {offsets = [10, 0], sizes = [2, 128], strides = [1, 1]} : vector<16x128xf32> to vector<2x128xf32>
    %c0_62 = arith.constant 0 : index
    %c0_63 = arith.constant 0 : index
    %230 = vector.load %arg4[%c0_62, %c0_63] : memref<2x256xf32, #tpu.memory_space<vmem>>, vector<2x256xf32>
    %cst_64 = arith.constant dense<0.000000e+00> : vector<2x256xf32>
    %231 = tpu.matmul %230, %2, %cst_64 {dimension_numbers = #tpu.dot_dimension_numbers<[1], [0], [0], [1], [0, 0, 1, 1], [], []>} : vector<2x256xf32>, vector<256x256xf32>, vector<2x256xf32> -> vector<2x256xf32>
    %232 = vector.extract_strided_slice %231 {offsets = [0, 0], sizes = [2, 128], strides = [1, 1]} : vector<2x256xf32> to vector<2x128xf32>
    %233 = arith.addf %229, %232 : vector<2x128xf32>
    %234 = math.tanh %233 : vector<2x128xf32>
    %235 = vector.broadcast %27 : vector<1x128xf32> to vector<2x128xf32>
    %236 = arith.mulf %234, %235 : vector<2x128xf32>
    %237 = vector.broadcast %30 : vector<1x128xf32> to vector<2x128xf32>
    %238 = arith.addf %236, %237 : vector<2x128xf32>
    %239 = vector.extract_strided_slice %238 {offsets = [0, 32], sizes = [2, 32], strides = [1, 1]} : vector<2x128xf32> to vector<2x32xf32>
    %240 = arith.mulf %239, %204 : vector<2x32xf32>
    %241 = vector.extract_strided_slice %238 {offsets = [0, 0], sizes = [2, 32], strides = [1, 1]} : vector<2x128xf32> to vector<2x32xf32>
    %242 = vector.extract_strided_slice %238 {offsets = [0, 64], sizes = [2, 32], strides = [1, 1]} : vector<2x128xf32> to vector<2x32xf32>
    %243 = arith.mulf %241, %242 : vector<2x32xf32>
    %244 = arith.addf %240, %243 : vector<2x32xf32>
    %245 = vector.extract_strided_slice %238 {offsets = [0, 96], sizes = [2, 32], strides = [1, 1]} : vector<2x128xf32> to vector<2x32xf32>
    %246 = math.tanh %244 : vector<2x32xf32>
    %247 = arith.mulf %245, %246 : vector<2x32xf32>
    %cst_65 = arith.constant dense<0.000000e+00> : vector<2x128xf32>
    %248 = tpu.matmul %247, %3, %cst_65 {dimension_numbers = #tpu.dot_dimension_numbers<[1], [0], [0], [1], [0, 0, 1, 1], [], []>} : vector<2x32xf32>, vector<32x128xf32>, vector<2x128xf32> -> vector<2x128xf32>
    %249 = vector.broadcast %6 : vector<1x128xf32> to vector<2x128xf32>
    %250 = arith.addf %248, %249 : vector<2x128xf32>
    %251 = vector.extract_strided_slice %231 {offsets = [0, 128], sizes = [2, 128], strides = [1, 1]} : vector<2x256xf32> to vector<2x128xf32>
    %252 = arith.addf %250, %251 : vector<2x128xf32>
    %253 = math.tanh %252 : vector<2x128xf32>
    %254 = vector.broadcast %27 : vector<1x128xf32> to vector<2x128xf32>
    %255 = arith.mulf %253, %254 : vector<2x128xf32>
    %256 = vector.broadcast %30 : vector<1x128xf32> to vector<2x128xf32>
    %257 = arith.addf %255, %256 : vector<2x128xf32>
    %258 = vector.extract_strided_slice %257 {offsets = [0, 32], sizes = [2, 32], strides = [1, 1]} : vector<2x128xf32> to vector<2x32xf32>
    %259 = arith.mulf %258, %223 : vector<2x32xf32>
    %260 = vector.extract_strided_slice %257 {offsets = [0, 0], sizes = [2, 32], strides = [1, 1]} : vector<2x128xf32> to vector<2x32xf32>
    %261 = vector.extract_strided_slice %257 {offsets = [0, 64], sizes = [2, 32], strides = [1, 1]} : vector<2x128xf32> to vector<2x32xf32>
    %262 = arith.mulf %260, %261 : vector<2x32xf32>
    %263 = arith.addf %259, %262 : vector<2x32xf32>
    %264 = vector.extract_strided_slice %257 {offsets = [0, 96], sizes = [2, 32], strides = [1, 1]} : vector<2x128xf32> to vector<2x32xf32>
    %265 = math.tanh %263 : vector<2x32xf32>
    %266 = arith.mulf %264, %265 : vector<2x32xf32>
    %c0_66 = arith.constant 0 : index
    %c0_67 = arith.constant 0 : index
    %267 = vector.load %arg4[%c0_66, %c0_67] : memref<2x256xf32, #tpu.memory_space<vmem>>, vector<2x32xf32>
    tpu.vector_store %arg4[%c0_66, %c0_67], %247 {strides = array<i32>} : memref<2x256xf32, #tpu.memory_space<vmem>>, vector<2x32xf32>,
    %c0_68 = arith.constant 0 : index
    %c128_69 = arith.constant 128 : index
    %268 = vector.load %arg4[%c0_68, %c128_69] : memref<2x256xf32, #tpu.memory_space<vmem>>, vector<2x32xf32>
    tpu.vector_store %arg4[%c0_68, %c128_69], %266 {strides = array<i32>} : memref<2x256xf32, #tpu.memory_space<vmem>>, vector<2x32xf32>,
    %269 = vector.extract_strided_slice %18 {offsets = [12, 0], sizes = [2, 128], strides = [1, 1]} : vector<16x128xf32> to vector<2x128xf32>
    %c0_70 = arith.constant 0 : index
    %c0_71 = arith.constant 0 : index
    %270 = vector.load %arg4[%c0_70, %c0_71] : memref<2x256xf32, #tpu.memory_space<vmem>>, vector<2x256xf32>
    %cst_72 = arith.constant dense<0.000000e+00> : vector<2x256xf32>
    %271 = tpu.matmul %270, %2, %cst_72 {dimension_numbers = #tpu.dot_dimension_numbers<[1], [0], [0], [1], [0, 0, 1, 1], [], []>} : vector<2x256xf32>, vector<256x256xf32>, vector<2x256xf32> -> vector<2x256xf32>
    %272 = vector.extract_strided_slice %271 {offsets = [0, 0], sizes = [2, 128], strides = [1, 1]} : vector<2x256xf32> to vector<2x128xf32>
    %273 = arith.addf %269, %272 : vector<2x128xf32>
    %274 = math.tanh %273 : vector<2x128xf32>
    %275 = vector.broadcast %27 : vector<1x128xf32> to vector<2x128xf32>
    %276 = arith.mulf %274, %275 : vector<2x128xf32>
    %277 = vector.broadcast %30 : vector<1x128xf32> to vector<2x128xf32>
    %278 = arith.addf %276, %277 : vector<2x128xf32>
    %279 = vector.extract_strided_slice %278 {offsets = [0, 32], sizes = [2, 32], strides = [1, 1]} : vector<2x128xf32> to vector<2x32xf32>
    %280 = arith.mulf %279, %244 : vector<2x32xf32>
    %281 = vector.extract_strided_slice %278 {offsets = [0, 0], sizes = [2, 32], strides = [1, 1]} : vector<2x128xf32> to vector<2x32xf32>
    %282 = vector.extract_strided_slice %278 {offsets = [0, 64], sizes = [2, 32], strides = [1, 1]} : vector<2x128xf32> to vector<2x32xf32>
    %283 = arith.mulf %281, %282 : vector<2x32xf32>
    %284 = arith.addf %280, %283 : vector<2x32xf32>
    %285 = vector.extract_strided_slice %278 {offsets = [0, 96], sizes = [2, 32], strides = [1, 1]} : vector<2x128xf32> to vector<2x32xf32>
    %286 = math.tanh %284 : vector<2x32xf32>
    %287 = arith.mulf %285, %286 : vector<2x32xf32>
    %cst_73 = arith.constant dense<0.000000e+00> : vector<2x128xf32>
    %288 = tpu.matmul %287, %3, %cst_73 {dimension_numbers = #tpu.dot_dimension_numbers<[1], [0], [0], [1], [0, 0, 1, 1], [], []>} : vector<2x32xf32>, vector<32x128xf32>, vector<2x128xf32> -> vector<2x128xf32>
    %289 = vector.broadcast %6 : vector<1x128xf32> to vector<2x128xf32>
    %290 = arith.addf %288, %289 : vector<2x128xf32>
    %291 = vector.extract_strided_slice %271 {offsets = [0, 128], sizes = [2, 128], strides = [1, 1]} : vector<2x256xf32> to vector<2x128xf32>
    %292 = arith.addf %290, %291 : vector<2x128xf32>
    %293 = math.tanh %292 : vector<2x128xf32>
    %294 = vector.broadcast %27 : vector<1x128xf32> to vector<2x128xf32>
    %295 = arith.mulf %293, %294 : vector<2x128xf32>
    %296 = vector.broadcast %30 : vector<1x128xf32> to vector<2x128xf32>
    %297 = arith.addf %295, %296 : vector<2x128xf32>
    %298 = vector.extract_strided_slice %297 {offsets = [0, 32], sizes = [2, 32], strides = [1, 1]} : vector<2x128xf32> to vector<2x32xf32>
    %299 = arith.mulf %298, %263 : vector<2x32xf32>
    %300 = vector.extract_strided_slice %297 {offsets = [0, 0], sizes = [2, 32], strides = [1, 1]} : vector<2x128xf32> to vector<2x32xf32>
    %301 = vector.extract_strided_slice %297 {offsets = [0, 64], sizes = [2, 32], strides = [1, 1]} : vector<2x128xf32> to vector<2x32xf32>
    %302 = arith.mulf %300, %301 : vector<2x32xf32>
    %303 = arith.addf %299, %302 : vector<2x32xf32>
    %304 = vector.extract_strided_slice %297 {offsets = [0, 96], sizes = [2, 32], strides = [1, 1]} : vector<2x128xf32> to vector<2x32xf32>
    %305 = math.tanh %303 : vector<2x32xf32>
    %306 = arith.mulf %304, %305 : vector<2x32xf32>
    %c0_74 = arith.constant 0 : index
    %c0_75 = arith.constant 0 : index
    %307 = vector.load %arg4[%c0_74, %c0_75] : memref<2x256xf32, #tpu.memory_space<vmem>>, vector<2x32xf32>
    tpu.vector_store %arg4[%c0_74, %c0_75], %287 {strides = array<i32>} : memref<2x256xf32, #tpu.memory_space<vmem>>, vector<2x32xf32>,
    %c0_76 = arith.constant 0 : index
    %c128_77 = arith.constant 128 : index
    %308 = vector.load %arg4[%c0_76, %c128_77] : memref<2x256xf32, #tpu.memory_space<vmem>>, vector<2x32xf32>
    tpu.vector_store %arg4[%c0_76, %c128_77], %306 {strides = array<i32>} : memref<2x256xf32, #tpu.memory_space<vmem>>, vector<2x32xf32>,
    %309 = vector.extract_strided_slice %18 {offsets = [14, 0], sizes = [2, 128], strides = [1, 1]} : vector<16x128xf32> to vector<2x128xf32>
    %c0_78 = arith.constant 0 : index
    %c0_79 = arith.constant 0 : index
    %310 = vector.load %arg4[%c0_78, %c0_79] : memref<2x256xf32, #tpu.memory_space<vmem>>, vector<2x256xf32>
    %cst_80 = arith.constant dense<0.000000e+00> : vector<2x256xf32>
    %311 = tpu.matmul %310, %2, %cst_80 {dimension_numbers = #tpu.dot_dimension_numbers<[1], [0], [0], [1], [0, 0, 1, 1], [], []>} : vector<2x256xf32>, vector<256x256xf32>, vector<2x256xf32> -> vector<2x256xf32>
    %312 = vector.extract_strided_slice %311 {offsets = [0, 0], sizes = [2, 128], strides = [1, 1]} : vector<2x256xf32> to vector<2x128xf32>
    %313 = arith.addf %309, %312 : vector<2x128xf32>
    %314 = math.tanh %313 : vector<2x128xf32>
    %315 = vector.broadcast %27 : vector<1x128xf32> to vector<2x128xf32>
    %316 = arith.mulf %314, %315 : vector<2x128xf32>
    %317 = vector.broadcast %30 : vector<1x128xf32> to vector<2x128xf32>
    %318 = arith.addf %316, %317 : vector<2x128xf32>
    %319 = vector.extract_strided_slice %318 {offsets = [0, 32], sizes = [2, 32], strides = [1, 1]} : vector<2x128xf32> to vector<2x32xf32>
    %320 = arith.mulf %319, %284 : vector<2x32xf32>
    %321 = vector.extract_strided_slice %318 {offsets = [0, 0], sizes = [2, 32], strides = [1, 1]} : vector<2x128xf32> to vector<2x32xf32>
    %322 = vector.extract_strided_slice %318 {offsets = [0, 64], sizes = [2, 32], strides = [1, 1]} : vector<2x128xf32> to vector<2x32xf32>
    %323 = arith.mulf %321, %322 : vector<2x32xf32>
    %324 = arith.addf %320, %323 : vector<2x32xf32>
    %325 = vector.extract_strided_slice %318 {offsets = [0, 96], sizes = [2, 32], strides = [1, 1]} : vector<2x128xf32> to vector<2x32xf32>
    %326 = math.tanh %324 : vector<2x32xf32>
    %327 = arith.mulf %325, %326 : vector<2x32xf32>
    %cst_81 = arith.constant dense<0.000000e+00> : vector<2x128xf32>
    %328 = tpu.matmul %327, %3, %cst_81 {dimension_numbers = #tpu.dot_dimension_numbers<[1], [0], [0], [1], [0, 0, 1, 1], [], []>} : vector<2x32xf32>, vector<32x128xf32>, vector<2x128xf32> -> vector<2x128xf32>
    %329 = vector.broadcast %6 : vector<1x128xf32> to vector<2x128xf32>
    %330 = arith.addf %328, %329 : vector<2x128xf32>
    %331 = vector.extract_strided_slice %311 {offsets = [0, 128], sizes = [2, 128], strides = [1, 1]} : vector<2x256xf32> to vector<2x128xf32>
    %332 = arith.addf %330, %331 : vector<2x128xf32>
    %333 = math.tanh %332 : vector<2x128xf32>
    %334 = vector.broadcast %27 : vector<1x128xf32> to vector<2x128xf32>
    %335 = arith.mulf %333, %334 : vector<2x128xf32>
    %336 = vector.broadcast %30 : vector<1x128xf32> to vector<2x128xf32>
    %337 = arith.addf %335, %336 : vector<2x128xf32>
    %338 = vector.extract_strided_slice %337 {offsets = [0, 32], sizes = [2, 32], strides = [1, 1]} : vector<2x128xf32> to vector<2x32xf32>
    %339 = arith.mulf %338, %303 : vector<2x32xf32>
    %340 = vector.extract_strided_slice %337 {offsets = [0, 0], sizes = [2, 32], strides = [1, 1]} : vector<2x128xf32> to vector<2x32xf32>
    %341 = vector.extract_strided_slice %337 {offsets = [0, 64], sizes = [2, 32], strides = [1, 1]} : vector<2x128xf32> to vector<2x32xf32>
    %342 = arith.mulf %340, %341 : vector<2x32xf32>
    %343 = arith.addf %339, %342 : vector<2x32xf32>
    %344 = vector.extract_strided_slice %337 {offsets = [0, 96], sizes = [2, 32], strides = [1, 1]} : vector<2x128xf32> to vector<2x32xf32>
    %345 = math.tanh %343 : vector<2x32xf32>
    %346 = arith.mulf %344, %345 : vector<2x32xf32>
    %cst_82 = arith.constant dense<0.000000e+00> : vector<2x4xf32>
    %347 = tpu.matmul %346, %4, %cst_82 {dimension_numbers = #tpu.dot_dimension_numbers<[1], [0], [0], [1], [0, 0, 1, 1], [], []>} : vector<2x32xf32>, vector<32x4xf32>, vector<2x4xf32> -> vector<2x4xf32>
    %348 = vector.broadcast %8 : vector<1x4xf32> to vector<2x4xf32>
    %349 = arith.addf %347, %348 : vector<2x4xf32>
    %c0_83 = arith.constant 0 : index
    %c0_84 = arith.constant 0 : index
    %350 = vector.load %arg3[%c0_83, %c0_84] : memref<2x4xf32, #tpu.memory_space<vmem>>, vector<2x4xf32>
    tpu.vector_store %arg3[%c0_83, %c0_84], %349 {strides = array<i32>} : memref<2x4xf32, #tpu.memory_space<vmem>>, vector<2x4xf32>,
    return
  }
}

</mosaic_0001>

<llo_original>
// kernel: cnn_lstm_forward.1
$region0: #{cnn_lstm_forward.1}
  #allocation0 [shape = 'u32[]', space=smem, size = 0x4, offset = 0x4, fixed_abs, tag = 'smem constant byte address 0x4 - core index']
  #allocation1 [shape = 'u32[144,128]{1,0:T(1,128)}', space=vmem, size = 0x12000, scoped, tag = 'internal scratch']
  #allocation2 [shape = 'f32[2,256]{1,0:T(2,128)}', space=vmem, size = 0x800, scoped, tag = 'scratch operand']
  %s0 = inlined_call_operand.vmem [shape: bf16[16,768], index: 0, kind: input, shape index: {}]
  %s1 = inlined_call_operand.vmem [shape: bf16[896,128], index: 1, kind: input, shape index: {}]
  %s2 = inlined_call_operand.vmem [shape: f32[296,256], index: 2, kind: input, shape index: {}]
  %s3 = inlined_call_operand.hbm [shape: f32[2,4], index: 3, kind: output, shape index: {}]
  %s4 = sld [smem:[#allocation0]]
  $region22: #{cnn_lstm_forward.1} parent=0
    _
  %s6 = ssub.s32 1, %s4
  %s7 = scalar_select 0, %s6, %s4
  $region1: #{cnn_lstm_forward.1} parent=0
    #allocation3 [shape = 'u8[1024]{0}', space=vmem, size = 0x400, scoped, tag = 'output window, operand 0, single buffered']
    #allocation4 [shape = 's32[1]{0}', space=sflag, size = 0x4, scoped, tag = 'scoped memory for cnn_lstm_forward.1']
    %8 = vsyncpa [#allocation4], 0
    // Predicated region
    $region2: #{cnn_lstm_forward.1} parent=1 // pred_check
      _
    $region3: #{cnn_lstm_forward.1} parent=1 // pred_check_branch
      %10 = sbr.rel (0) target = $region5
    $region4: #{cnn_lstm_forward.1} parent=1 // pred_region
      _
    $region5: #{cnn_lstm_forward.1} parent=1 // pred_fallthru
      _
    // Predicated region
    $region6: #{cnn_lstm_forward.1} parent=1 // pred_check
      _
    $region7: #{cnn_lstm_forward.1} parent=1 // pred_check_branch
      %12 = sbr.rel (0) target = $region9
    $region8: #{cnn_lstm_forward.1} parent=1 // pred_region
      _
    $region9: #{cnn_lstm_forward.1} parent=1 // pred_fallthru
      _
    // Predicated region
    $region10: #{cnn_lstm_forward.1} parent=1 // pred_check
      _
    $region11: #{cnn_lstm_forward.1} parent=1 // pred_check_branch
      %14 = sbr.rel (0) target = $region13
    $region12: #{cnn_lstm_forward.1} parent=1 // pred_region
      _
    $region13: #{cnn_lstm_forward.1} parent=1 // pred_fallthru
      _
    %v16 = vld [vmem:[%s1] sm:$0xf]
    %v17 = vld [vmem:[%s1 + $0x4] sm:$0xf]
    %v18 = vld [vmem:[%s1 + $0x8] sm:$0xf]
    %v19 = vld [vmem:[%s1 + $0xc] sm:$0xf]
    %v20 = vld [vmem:[%s1 + $0x10] sm:$0xf]
    %v21 = vld [vmem:[%s1 + $0x14] sm:$0xf]
    %v22 = vld [vmem:[%s1 + $0x18] sm:$0xf]
    %v23 = vld [vmem:[%s1 + $0x1c] sm:$0xf]
    %v24 = vld [vmem:[%s1 + $0x20] sm:$0xf]
    %v25 = vld [vmem:[%s1 + $0x24] sm:$0xf]
    %v26 = vld [vmem:[%s1 + $0x28] sm:$0xf]
    %v27 = vld [vmem:[%s1 + $0x2c] sm:$0xf]
    %v28 = vld [vmem:[%s1 + $0x30] sm:$0xf]
    %v29 = vld [vmem:[%s1 + $0x34] sm:$0xf]
    %v30 = vld [vmem:[%s1 + $0x38] sm:$0xf]
    %v31 = vld [vmem:[%s1 + $0x3c] sm:$0xf]
    %v32 = vld [vmem:[%s1 + $0x40] sm:$0xf]
    %v33 = vld [vmem:[%s1 + $0x44] sm:$0xf]
    %v34 = vld [vmem:[%s1 + $0x48] sm:$0xf]
    %v35 = vld [vmem:[%s1 + $0x4c] sm:$0xf]
    %v36 = vld [vmem:[%s1 + $0x50] sm:$0xf]
    %v37 = vld [vmem:[%s1 + $0x54] sm:$0xf]
    %v38 = vld [vmem:[%s1 + $0x58] sm:$0xf]
    %v39 = vld [vmem:[%s1 + $0x5c] sm:$0xf]
    %v40 = vld [vmem:[%s1 + $0x60] sm:$0xf]
    %v41 = vld [vmem:[%s1 + $0x64] sm:$0xf]
    %v42 = vld [vmem:[%s1 + $0x68] sm:$0xf]
    %v43 = vld [vmem:[%s1 + $0x6c] sm:$0xf]
    %v44 = vld [vmem:[%s1 + $0x70] sm:$0xf]
    %v45 = vld [vmem:[%s1 + $0x74] sm:$0xf]
    %v46 = vld [vmem:[%s1 + $0x78] sm:$0xf]
    %v47 = vld [vmem:[%s1 + $0x7c] sm:$0xf]
    %v48 = vld [vmem:[%s1 + $0x80] sm:$0xf]
    %v49 = vld [vmem:[%s1 + $0x84] sm:$0xf]
    %v50 = vld [vmem:[%s1 + $0x88] sm:$0xf]
    %v51 = vld [vmem:[%s1 + $0x8c] sm:$0xf]
    %v52 = vld [vmem:[%s1 + $0x90] sm:$0xf]
    %v53 = vld [vmem:[%s1 + $0x94] sm:$0xf]
    %v54 = vld [vmem:[%s1 + $0x98] sm:$0xf]
    %v55 = vld [vmem:[%s1 + $0x9c] sm:$0xf]
    %v56 = vld [vmem:[%s1 + $0xa0] sm:$0xf]
    %v57 = vld [vmem:[%s1 + $0xa4] sm:$0xf]
    %v58 = vld [vmem:[%s1 + $0xa8] sm:$0xf]
    %v59 = vld [vmem:[%s1 + $0xac] sm:$0xf]
    %v60 = vld [vmem:[%s1 + $0xb0] sm:$0xf]
    %v61 = vld [vmem:[%s1 + $0xb4] sm:$0xf]
    %v62 = vld [vmem:[%s1 + $0xb8] sm:$0xf]
    %v63 = vld [vmem:[%s1 + $0xbc] sm:$0xf]
    %v64 = vld [vmem:[%s1 + $0xc0] sm:$0xf]
    %v65 = vld [vmem:[%s1 + $0xc4] sm:$0xf]
    %v66 = vld [vmem:[%s1 + $0xc8] sm:$0xf]
    %v67 = vld [vmem:[%s1 + $0xcc] sm:$0xf]
    %v68 = vld [vmem:[%s1 + $0xd0] sm:$0xf]
    %v69 = vld [vmem:[%s1 + $0xd4] sm:$0xf]
    %v70 = vld [vmem:[%s1 + $0xd8] sm:$0xf]
    %v71 = vld [vmem:[%s1 + $0xdc] sm:$0xf]
    %v72 = vld [vmem:[%s1 + $0xe0] sm:$0xf]
    %v73 = vld [vmem:[%s1 + $0xe4] sm:$0xf]
    %v74 = vld [vmem:[%s1 + $0xe8] sm:$0xf]
    %v75 = vld [vmem:[%s1 + $0xec] sm:$0xf]
    %v76 = vld [vmem:[%s1 + $0xf0] sm:$0xf]
    %v77 = vld [vmem:[%s1 + $0xf4] sm:$0xf]
    %v78 = vld [vmem:[%s1 + $0xf8] sm:$0xf]
    %v79 = vld [vmem:[%s1 + $0xfc] sm:$0xf]
    %v80 = vld [vmem:[%s1 + $0x100] sm:$0xf]
    %v81 = vld [vmem:[%s1 + $0x104] sm:$0xf]
    %v82 = vld [vmem:[%s1 + $0x108] sm:$0xf]
    %v83 = vld [vmem:[%s1 + $0x10c] sm:$0xf]
    %v84 = vld [vmem:[%s1 + $0x110] sm:$0xf]
    %v85 = vld [vmem:[%s1 + $0x114] sm:$0xf]
    %v86 = vld [vmem:[%s1 + $0x118] sm:$0xf]
    %v87 = vld [vmem:[%s1 + $0x11c] sm:$0xf]
    %v88 = vld [vmem:[%s1 + $0x120] sm:$0xf]
    %v89 = vld [vmem:[%s1 + $0x124] sm:$0xf]
    %v90 = vld [vmem:[%s1 + $0x128] sm:$0xf]
    %v91 = vld [vmem:[%s1 + $0x12c] sm:$0xf]
    %v92 = vld [vmem:[%s1 + $0x130] sm:$0xf]
    %v93 = vld [vmem:[%s1 + $0x134] sm:$0xf]
    %v94 = vld [vmem:[%s1 + $0x138] sm:$0xf]
    %v95 = vld [vmem:[%s1 + $0x13c] sm:$0xf]
    %v96 = vld [vmem:[%s1 + $0x140] sm:$0xf]
    %v97 = vld [vmem:[%s1 + $0x144] sm:$0xf]
    %v98 = vld [vmem:[%s1 + $0x148] sm:$0xf]
    %v99 = vld [vmem:[%s1 + $0x14c] sm:$0xf]
    %v100 = vld [vmem:[%s1 + $0x150] sm:$0xf]
    %v101 = vld [vmem:[%s1 + $0x154] sm:$0xf]
    %v102 = vld [vmem:[%s1 + $0x158] sm:$0xf]
    %v103 = vld [vmem:[%s1 + $0x15c] sm:$0xf]
    %v104 = vld [vmem:[%s1 + $0x160] sm:$0xf]
    %v105 = vld [vmem:[%s1 + $0x164] sm:$0xf]
    %v106 = vld [vmem:[%s1 + $0x168] sm:$0xf]
    %v107 = vld [vmem:[%s1 + $0x16c] sm:$0xf]
    %v108 = vld [vmem:[%s1 + $0x170] sm:$0xf]
    %v109 = vld [vmem:[%s1 + $0x174] sm:$0xf]
    %v110 = vld [vmem:[%s1 + $0x178] sm:$0xf]
    %v111 = vld [vmem:[%s1 + $0x17c] sm:$0xf]
    %v112 = vld [vmem:[%s1 + $0x180] sm:$0xf]
    %v113 = vld [vmem:[%s1 + $0x184] sm:$0xf]
    %v114 = vld [vmem:[%s1 + $0x188] sm:$0xf]
    %v115 = vld [vmem:[%s1 + $0x18c] sm:$0xf]
    %v116 = vld [vmem:[%s1 + $0x190] sm:$0xf]
    %v117 = vld [vmem:[%s1 + $0x194] sm:$0xf]
    %v118 = vld [vmem:[%s1 + $0x198] sm:$0xf]
    %v119 = vld [vmem:[%s1 + $0x19c] sm:$0xf]
    %v120 = vld [vmem:[%s1 + $0x1a0] sm:$0xf]
    %v121 = vld [vmem:[%s1 + $0x1a4] sm:$0xf]
    %v122 = vld [vmem:[%s1 + $0x1a8] sm:$0xf]
    %v123 = vld [vmem:[%s1 + $0x1ac] sm:$0xf]
    %v124 = vld [vmem:[%s1 + $0x1b0] sm:$0xf]
    %v125 = vld [vmem:[%s1 + $0x1b4] sm:$0xf]
    %v126 = vld [vmem:[%s1 + $0x1b8] sm:$0xf]
    %v127 = vld [vmem:[%s1 + $0x1bc] sm:$0xf]
    %v128 = vld [vmem:[%s2] sm:$0xff]
    %v129 = vld [vmem:[%s2 + $0x8] sm:$0xff]
    %v130 = vld [vmem:[%s2 + $0x10] sm:$0xff]
    %v131 = vld [vmem:[%s2 + $0x18] sm:$0xff]
    %v132 = vld [vmem:[%s2 + $0x20] sm:$0xff]
    %v133 = vld [vmem:[%s2 + $0x28] sm:$0xff]
    %v134 = vld [vmem:[%s2 + $0x30] sm:$0xff]
    %v135 = vld [vmem:[%s2 + $0x38] sm:$0xff]
    %v136 = vld [vmem:[%s2 + $0x40] sm:$0xff]
    %v137 = vld [vmem:[%s2 + $0x48] sm:$0xff]
    %v138 = vld [vmem:[%s2 + $0x50] sm:$0xff]
    %v139 = vld [vmem:[%s2 + $0x58] sm:$0xff]
    %v140 = vld [vmem:[%s2 + $0x60] sm:$0xff]
    %v141 = vld [vmem:[%s2 + $0x68] sm:$0xff]
    %v142 = vld [vmem:[%s2 + $0x70] sm:$0xff]
    %v143 = vld [vmem:[%s2 + $0x78] sm:$0xff]
    %v144 = vld [vmem:[%s2 + $0x80] sm:$0xff]
    %v145 = vld [vmem:[%s2 + $0x88] sm:$0xff]
    %v146 = vld [vmem:[%s2 + $0x90] sm:$0xff]
    %v147 = vld [vmem:[%s2 + $0x98] sm:$0xff]
    %v148 = vld [vmem:[%s2 + $0xa0] sm:$0xff]
    %v149 = vld [vmem:[%s2 + $0xa8] sm:$0xff]
    %v150 = vld [vmem:[%s2 + $0xb0] sm:$0xff]
    %v151 = vld [vmem:[%s2 + $0xb8] sm:$0xff]
    %v152 = vld [vmem:[%s2 + $0xc0] sm:$0xff]
    %v153 = vld [vmem:[%s2 + $0xc8] sm:$0xff]
    %v154 = vld [vmem:[%s2 + $0xd0] sm:$0xff]
    %v155 = vld [vmem:[%s2 + $0xd8] sm:$0xff]
    %v156 = vld [vmem:[%s2 + $0xe0] sm:$0xff]
    %v157 = vld [vmem:[%s2 + $0xe8] sm:$0xff]
    %v158 = vld [vmem:[%s2 + $0xf0] sm:$0xff]
    %v159 = vld [vmem:[%s2 + $0xf8] sm:$0xff]
    %v160 = vld [vmem:[%s2 + $0x100] sm:$0xff]
    %v161 = vld [vmem:[%s2 + $0x108] sm:$0xff]
    %v162 = vld [vmem:[%s2 + $0x110] sm:$0xff]
    %v163 = vld [vmem:[%s2 + $0x118] sm:$0xff]
    %v164 = vld [vmem:[%s2 + $0x120] sm:$0xff]
    %v165 = vld [vmem:[%s2 + $0x128] sm:$0xff]
    %v166 = vld [vmem:[%s2 + $0x130] sm:$0xff]
    %v167 = vld [vmem:[%s2 + $0x138] sm:$0xff]
    %v168 = vld [vmem:[%s2 + $0x140] sm:$0xff]
    %v169 = vld [vmem:[%s2 + $0x148] sm:$0xff]
    %v170 = vld [vmem:[%s2 + $0x150] sm:$0xff]
    %v171 = vld [vmem:[%s2 + $0x158] sm:$0xff]
    %v172 = vld [vmem:[%s2 + $0x160] sm:$0xff]
    %v173 = vld [vmem:[%s2 + $0x168] sm:$0xff]
    %v174 = vld [vmem:[%s2 + $0x170] sm:$0xff]
    %v175 = vld [vmem:[%s2 + $0x178] sm:$0xff]
    %v176 = vld [vmem:[%s2 + $0x180] sm:$0xff]
    %v177 = vld [vmem:[%s2 + $0x188] sm:$0xff]
    %v178 = vld [vmem:[%s2 + $0x190] sm:$0xff]
    %v179 = vld [vmem:[%s2 + $0x198] sm:$0xff]
    %v180 = vld [vmem:[%s2 + $0x1a0] sm:$0xff]
    %v181 = vld [vmem:[%s2 + $0x1a8] sm:$0xff]
    %v182 = vld [vmem:[%s2 + $0x1b0] sm:$0xff]
    %v183 = vld [vmem:[%s2 + $0x1b8] sm:$0xff]
    %v184 = vld [vmem:[%s2 + $0x1c0] sm:$0xff]
    %v185 = vld [vmem:[%s2 + $0x1c8] sm:$0xff]
    %v186 = vld [vmem:[%s2 + $0x1d0] sm:$0xff]
    %v187 = vld [vmem:[%s2 + $0x1d8] sm:$0xff]
    %v188 = vld [vmem:[%s2 + $0x1e0] sm:$0xff]
    %v189 = vld [vmem:[%s2 + $0x1e8] sm:$0xff]
    %v190 = vld [vmem:[%s2 + $0x1f0] sm:$0xff]
    %v191 = vld [vmem:[%s2 + $0x1f8] sm:$0xff]
    %v192 = vld [vmem:[%s2 + $0x200] sm:$0xff]
    %v193 = vld [vmem:[%s2 + $0x210] sm:$0xff]
    %v194 = vld [vmem:[%s2 + $0x220] sm:$0xff]
    %v195 = vld [vmem:[%s2 + $0x230] sm:$0xff]
    %v196 = vld [vmem:[%s2 + $0x208] sm:$0xff]
    %v197 = vld [vmem:[%s2 + $0x218] sm:$0xff]
    %v198 = vld [vmem:[%s2 + $0x228] sm:$0xff]
    %v199 = vld [vmem:[%s2 + $0x238] sm:$0xff]
    %v200 = vld [vmem:[%s2 + $0x240] ss:$0 sm:$0xff]
    %v201 = vld [vmem:[%s2 + $0x248] ss:$0 sm:$0xff]
    %v202 = vld [vmem:[%s2 + $0x241] ss:$0 sm:$0xff]
    %v203 = vld [vmem:[%s2 + $0x249] ss:$0 sm:$0xff]
    %v204 = vld [vmem:[%s0] sm:$0xff]
    %v205 = vld [vmem:[%s0 + $0x8] sm:$0xff]
    %v206 = vld [vmem:[%s0 + $0x10] sm:$0xff]
    %v207 = vld [vmem:[%s0 + $0x18] sm:$0xff]
    %v208 = vld [vmem:[%s0 + $0x20] sm:$0xff]
    %v209 = vld [vmem:[%s0 + $0x28] sm:$0xff]
    %v216 = vunpack.c.l.b16 %v204
    %v217 = vunpack.c.h.b16 %v204
    %v218 = vunpack.c.l.b16 %v205
    %v219 = vunpack.c.h.b16 %v205
    %v220 = vunpack.c.l.b16 %v206
    %v221 = vunpack.c.h.b16 %v206
    %v222 = vunpack.c.l.b16 %v207
    %v223 = vunpack.c.h.b16 %v207
    %v224 = vunpack.c.l.b16 %v208
    %v225 = vunpack.c.h.b16 %v208
    %v226 = vunpack.c.l.b16 %v209
    %v227 = vunpack.c.h.b16 %v209
    %v228 = vpack.c.b16 %v222, %v216
    %v229 = vpack.c.b16 %v223, %v217
    %v230 = vpack.c.b16 %v224, %v218
    %v231 = vpack.c.b16 %v225, %v219
    %v232 = vpack.c.b16 %v226, %v220
    %v233 = vpack.c.b16 %v227, %v221
    %v336 = vunpack.c.l.b16 %v16
    %v337 = vunpack.c.l.b16 %v17
    %v338 = vunpack.c.l.b16 %v18
    %v339 = vunpack.c.l.b16 %v19
    %v340 = vunpack.c.l.b16 %v20
    %v341 = vunpack.c.l.b16 %v21
    %v342 = vunpack.c.l.b16 %v22
    %v343 = vunpack.c.l.b16 %v23
    %v344 = vunpack.c.l.b16 %v24
    %v345 = vunpack.c.l.b16 %v25
    %v346 = vunpack.c.l.b16 %v26
    %v347 = vunpack.c.l.b16 %v27
    %v348 = vunpack.c.l.b16 %v28
    %v349 = vunpack.c.l.b16 %v29
    %v350 = vunpack.c.l.b16 %v30
    %v351 = vunpack.c.l.b16 %v31
    %v352 = vunpack.c.l.b16 %v32
    %v353 = vunpack.c.l.b16 %v33
    %v354 = vunpack.c.l.b16 %v34
    %v355 = vunpack.c.l.b16 %v35
    %v356 = vunpack.c.l.b16 %v36
    %v357 = vunpack.c.l.b16 %v37
    %v358 = vunpack.c.l.b16 %v38
    %v359 = vunpack.c.l.b16 %v39
    %v360 = vunpack.c.l.b16 %v40
    %v361 = vunpack.c.l.b16 %v41
    %v362 = vunpack.c.l.b16 %v42
    %v363 = vunpack.c.l.b16 %v43
    %v364 = vunpack.c.l.b16 %v44
    %v365 = vunpack.c.l.b16 %v45
    %v366 = vunpack.c.l.b16 %v46
    %v367 = vunpack.c.l.b16 %v47
    %v368 = vunpack.c.l.b16 %v48
    %v369 = vunpack.c.l.b16 %v49
    %v370 = vunpack.c.l.b16 %v50
    %v371 = vunpack.c.l.b16 %v51
    %v372 = vunpack.c.l.b16 %v52
    %v373 = vunpack.c.l.b16 %v53
    %v374 = vunpack.c.l.b16 %v54
    %v375 = vunpack.c.l.b16 %v55
    %v376 = vunpack.c.l.b16 %v56
    %v377 = vunpack.c.l.b16 %v57
    %v378 = vunpack.c.l.b16 %v58
    %v379 = vunpack.c.l.b16 %v59
    %v380 = vunpack.c.l.b16 %v60
    %v381 = vunpack.c.l.b16 %v61
    %v382 = vunpack.c.l.b16 %v62
    %v383 = vunpack.c.l.b16 %v63
    %v384 = vunpack.c.l.b16 %v64
    %v385 = vunpack.c.l.b16 %v65
    %v386 = vunpack.c.l.b16 %v66
    %v387 = vunpack.c.l.b16 %v67
    %v388 = vunpack.c.l.b16 %v68
    %v389 = vunpack.c.l.b16 %v69
    %v390 = vunpack.c.l.b16 %v70
    %v391 = vunpack.c.l.b16 %v71
    %v392 = vunpack.c.l.b16 %v72
    %v393 = vunpack.c.l.b16 %v73
    %v394 = vunpack.c.l.b16 %v74
    %v395 = vunpack.c.l.b16 %v75
    %v396 = vunpack.c.l.b16 %v76
    %v397 = vunpack.c.l.b16 %v77
    %v398 = vunpack.c.l.b16 %v78
    %v399 = vunpack.c.l.b16 %v79
    %v400 = vunpack.c.l.b16 %v80
    %v401 = vunpack.c.l.b16 %v81
    %v402 = vunpack.c.l.b16 %v82
    %v403 = vunpack.c.l.b16 %v83
    %v404 = vunpack.c.l.b16 %v84
    %v405 = vunpack.c.l.b16 %v85
    %v406 = vunpack.c.l.b16 %v86
    %v407 = vunpack.c.l.b16 %v87
    %v408 = vunpack.c.l.b16 %v88
    %v409 = vunpack.c.l.b16 %v89
    %v410 = vunpack.c.l.b16 %v90
    %v411 = vunpack.c.l.b16 %v91
    %v412 = vunpack.c.l.b16 %v92
    %v413 = vunpack.c.l.b16 %v93
    %v414 = vunpack.c.l.b16 %v94
    %v415 = vunpack.c.l.b16 %v95
    %v416 = vunpack.c.l.b16 %v96
    %v417 = vunpack.c.l.b16 %v97
    %v418 = vunpack.c.l.b16 %v98
    %v419 = vunpack.c.l.b16 %v99
    %v420 = vunpack.c.l.b16 %v100
    %v421 = vunpack.c.l.b16 %v101
    %v422 = vunpack.c.l.b16 %v102
    %v423 = vunpack.c.l.b16 %v103
    %v424 = vunpack.c.l.b16 %v104
    %v425 = vunpack.c.l.b16 %v105
    %v426 = vunpack.c.l.b16 %v106
    %v427 = vunpack.c.l.b16 %v107
    %v428 = vunpack.c.l.b16 %v108
    %v429 = vunpack.c.l.b16 %v109
    %v430 = vunpack.c.l.b16 %v110
    %v431 = vunpack.c.l.b16 %v111
    %v432 = vpack.c.b16 %v337, %v336
    %v433 = vpack.c.b16 %v339, %v338
    %v434 = vpack.c.b16 %v341, %v340
    %v435 = vpack.c.b16 %v343, %v342
    %v436 = vpack.c.b16 %v345, %v344
    %v437 = vpack.c.b16 %v347, %v346
    %v438 = vpack.c.b16 %v349, %v348
    %v439 = vpack.c.b16 %v351, %v350
    %v440 = vpack.c.b16 %v353, %v352
    %v441 = vpack.c.b16 %v355, %v354
    %v442 = vpack.c.b16 %v357, %v356
    %v443 = vpack.c.b16 %v359, %v358
    %v444 = vpack.c.b16 %v361, %v360
    %v445 = vpack.c.b16 %v363, %v362
    %v446 = vpack.c.b16 %v365, %v364
    %v447 = vpack.c.b16 %v367, %v366
    %v448 = vpack.c.b16 %v369, %v368
    %v449 = vpack.c.b16 %v371, %v370
    %v450 = vpack.c.b16 %v373, %v372
    %v451 = vpack.c.b16 %v375, %v374
    %v452 = vpack.c.b16 %v377, %v376
    %v453 = vpack.c.b16 %v379, %v378
    %v454 = vpack.c.b16 %v381, %v380
    %v455 = vpack.c.b16 %v383, %v382
    %v456 = vpack.c.b16 %v385, %v384
    %v457 = vpack.c.b16 %v387, %v386
    %v458 = vpack.c.b16 %v389, %v388
    %v459 = vpack.c.b16 %v391, %v390
    %v460 = vpack.c.b16 %v393, %v392
    %v461 = vpack.c.b16 %v395, %v394
    %v462 = vpack.c.b16 %v397, %v396
    %v463 = vpack.c.b16 %v399, %v398
    %v464 = vpack.c.b16 %v401, %v400
    %v465 = vpack.c.b16 %v403, %v402
    %v466 = vpack.c.b16 %v405, %v404
    %v467 = vpack.c.b16 %v407, %v406
    %v468 = vpack.c.b16 %v409, %v408
    %v469 = vpack.c.b16 %v411, %v410
    %v470 = vpack.c.b16 %v413, %v412
    %v471 = vpack.c.b16 %v415, %v414
    %v472 = vpack.c.b16 %v417, %v416
    %v473 = vpack.c.b16 %v419, %v418
    %v474 = vpack.c.b16 %v421, %v420
    %v475 = vpack.c.b16 %v423, %v422
    %v476 = vpack.c.b16 %v425, %v424
    %v477 = vpack.c.b16 %v427, %v426
    %v478 = vpack.c.b16 %v429, %v428
    %v479 = vpack.c.b16 %v431, %v430
    %528 = vmatprep.subr.bf16.mxu0 0
    %529 = vmatpush1.bf16.msra.mxu0 %v432
    %530 = vmatprep.subr.bf16.mxu0 0
    %531 = vmatpush1.bf16.msra.mxu0 %v433
    %532 = vmatprep.subr.bf16.mxu0 0
    %533 = vmatpush1.bf16.msra.mxu0 %v434
    %534 = vmatprep.subr.bf16.mxu0 0
    %535 = vmatpush1.bf16.msra.mxu0 %v435
    %536 = vmatprep.subr.bf16.mxu0 0
    %537 = vmatpush1.bf16.msra.mxu0 %v436
    %538 = vmatprep.subr.bf16.mxu0 0
    %539 = vmatpush1.bf16.msra.mxu0 %v437
    %540 = vmatprep.subr.bf16.mxu0 0
    %541 = vmatpush1.bf16.msra.mxu0 %v438
    %542 = vmatprep.subr.bf16.mxu0 0
    %543 = vmatpush1.bf16.msra.mxu0 %v439
    %544 = vmatprep.subr.bf16.mxu0 0
    %545 = vmatpush1.bf16.msra.mxu0 %v440
    %546 = vmatprep.subr.bf16.mxu0 0
    %547 = vmatpush1.bf16.msra.mxu0 %v441
    %548 = vmatprep.subr.bf16.mxu0 0
    %549 = vmatpush1.bf16.msra.mxu0 %v442
    %550 = vmatprep.subr.bf16.mxu0 0
    %551 = vmatpush1.bf16.msra.mxu0 %v443
    %552 = vmatprep.subr.bf16.mxu0 0
    %553 = vmatpush1.bf16.msra.mxu0 %v444
    %554 = vmatprep.subr.bf16.mxu0 0
    %555 = vmatpush1.bf16.msra.mxu0 %v445
    %556 = vmatprep.subr.bf16.mxu0 0
    %557 = vmatpush1.bf16.msra.mxu0 %v446
    %558 = vmatprep.subr.bf16.mxu0 0
    %559 = vmatpush1.bf16.msra.mxu0 %v447
    %560 = vmatprep.mubr.bf16.mxu0 %v229
    %561 = vmatmul.mubr.bf16.gmra.mrb[0].mxu0 %v228
    %v562 = vpop.f32.mrb[0].mxu0
    %v563 = vadd.f32 %v200, %v562
    %v564 = vpop.f32.mrb[0].mxu0
    %v565 = vpop.f32.mrb[0].mxu0
    %v566 = vadd.f32 %v200, %v565
    %v567 = vpop.f32.mrb[0].mxu0
    %568 = vdwg.mxu0
    %569 = vmatprep.subr.bf16.mxu0 0
    %570 = vmatpush1.bf16.msra.mxu0 %v448
    %571 = vmatprep.subr.bf16.mxu0 0
    %572 = vmatpush1.bf16.msra.mxu0 %v449
    %573 = vmatprep.subr.bf16.mxu0 0
    %574 = vmatpush1.bf16.msra.mxu0 %v450
    %575 = vmatprep.subr.bf16.mxu0 0
    %576 = vmatpush1.bf16.msra.mxu0 %v451
    %577 = vmatprep.subr.bf16.mxu0 0
    %578 = vmatpush1.bf16.msra.mxu0 %v452
    %579 = vmatprep.subr.bf16.mxu0 0
    %580 = vmatpush1.bf16.msra.mxu0 %v453
    %581 = vmatprep.subr.bf16.mxu0 0
    %582 = vmatpush1.bf16.msra.mxu0 %v454
    %583 = vmatprep.subr.bf16.mxu0 0
    %584 = vmatpush1.bf16.msra.mxu0 %v455
    %585 = vmatprep.subr.bf16.mxu0 0
    %586 = vmatpush1.bf16.msra.mxu0 %v456
    %587 = vmatprep.subr.bf16.mxu0 0
    %588 = vmatpush1.bf16.msra.mxu0 %v457
    %589 = vmatprep.subr.bf16.mxu0 0
    %590 = vmatpush1.bf16.msra.mxu0 %v458
    %591 = vmatprep.subr.bf16.mxu0 0
    %592 = vmatpush1.bf16.msra.mxu0 %v459
    %593 = vmatprep.subr.bf16.mxu0 0
    %594 = vmatpush1.bf16.msra.mxu0 %v460
    %595 = vmatprep.subr.bf16.mxu0 0
    %596 = vmatpush1.bf16.msra.mxu0 %v461
    %597 = vmatprep.subr.bf16.mxu0 0
    %598 = vmatpush1.bf16.msra.mxu0 %v462
    %599 = vmatprep.subr.bf16.mxu0 0
    %600 = vmatpush1.bf16.msra.mxu0 %v463
    %601 = vmatprep.mubr.bf16.mxu0 %v231
    %602 = vmatmul.mubr.bf16.gmra.mrb[0].mxu0 %v230
    %v603 = vpop.f32.mrb[0].mxu0
    %v604 = vadd.f32 %v563, %v603
    %v605 = vpop.f32.mrb[0].mxu0
    %v606 = vpop.f32.mrb[0].mxu0
    %v607 = vadd.f32 %v566, %v606
    %v608 = vpop.f32.mrb[0].mxu0
    %609 = vdwg.mxu0
    %610 = vmatprep.subr.bf16.mxu0 0
    %611 = vmatpush1.bf16.msra.mxu0 %v464
    %612 = vmatprep.subr.bf16.mxu0 0
    %613 = vmatpush1.bf16.msra.mxu0 %v465
    %614 = vmatprep.subr.bf16.mxu0 0
    %615 = vmatpush1.bf16.msra.mxu0 %v466
    %616 = vmatprep.subr.bf16.mxu0 0
    %617 = vmatpush1.bf16.msra.mxu0 %v467
    %618 = vmatprep.subr.bf16.mxu0 0
    %619 = vmatpush1.bf16.msra.mxu0 %v468
    %620 = vmatprep.subr.bf16.mxu0 0
    %621 = vmatpush1.bf16.msra.mxu0 %v469
    %622 = vmatprep.subr.bf16.mxu0 0
    %623 = vmatpush1.bf16.msra.mxu0 %v470
    %624 = vmatprep.subr.bf16.mxu0 0
    %625 = vmatpush1.bf16.msra.mxu0 %v471
    %626 = vmatprep.subr.bf16.mxu0 0
    %627 = vmatpush1.bf16.msra.mxu0 %v472
    %628 = vmatprep.subr.bf16.mxu0 0
    %629 = vmatpush1.bf16.msra.mxu0 %v473
    %630 = vmatprep.subr.bf16.mxu0 0
    %631 = vmatpush1.bf16.msra.mxu0 %v474
    %632 = vmatprep.subr.bf16.mxu0 0
    %633 = vmatpush1.bf16.msra.mxu0 %v475
    %634 = vmatprep.subr.bf16.mxu0 0
    %635 = vmatpush1.bf16.msra.mxu0 %v476
    %636 = vmatprep.subr.bf16.mxu0 0
    %637 = vmatpush1.bf16.msra.mxu0 %v477
    %638 = vmatprep.subr.bf16.mxu0 0
    %639 = vmatpush1.bf16.msra.mxu0 %v478
    %640 = vmatprep.subr.bf16.mxu0 0
    %641 = vmatpush1.bf16.msra.mxu0 %v479
    %642 = vmatprep.mubr.bf16.mxu0 %v233
    %643 = vmatmul.mubr.bf16.gmra.mrb[0].mxu0 %v232
    %v644 = vpop.f32.mrb[0].mxu0
    %v645 = vadd.f32 %v604, %v644
    %v646 = vpop.f32.mrb[0].mxu0
    %v647 = vpop.f32.mrb[0].mxu0
    %v648 = vadd.f32 %v607, %v647
    %v649 = vpop.f32.mrb[0].mxu0
    %650 = vdwg.mxu0
    %v651 = vmax.f32 %v645, 0.0
    %v652 = vmax.f32 %v648, 0.0
    %v653 = vpack.c.bf16 %v652, %v651
    %v670 = vunpack.c.l.b16 %v112
    %v671 = vunpack.c.l.b16 %v113
    %v672 = vunpack.c.l.b16 %v114
    %v673 = vunpack.c.l.b16 %v115
    %v674 = vunpack.c.l.b16 %v116
    %v675 = vunpack.c.l.b16 %v117
    %v676 = vunpack.c.l.b16 %v118
    %v677 = vunpack.c.l.b16 %v119
    %v678 = vunpack.c.l.b16 %v120
    %v679 = vunpack.c.l.b16 %v121
    %v680 = vunpack.c.l.b16 %v122
    %v681 = vunpack.c.l.b16 %v123
    %v682 = vunpack.c.l.b16 %v124
    %v683 = vunpack.c.l.b16 %v125
    %v684 = vunpack.c.l.b16 %v126
    %v685 = vunpack.c.l.b16 %v127
    %v686 = vpack.c.b16 %v671, %v670
    %v687 = vpack.c.b16 %v673, %v672
    %v688 = vpack.c.b16 %v675, %v674
    %v689 = vpack.c.b16 %v677, %v676
    %v690 = vpack.c.b16 %v679, %v678
    %v691 = vpack.c.b16 %v681, %v680
    %v692 = vpack.c.b16 %v683, %v682
    %v693 = vpack.c.b16 %v685, %v684
    %702 = vmatprep.subr.bf16.mxu0 0
    %703 = vmatpush1.bf16.msra.mxu0 %v686
    %704 = vmatprep.subr.bf16.mxu0 0
    %705 = vmatpush1.bf16.msra.mxu0 %v687
    %706 = vmatprep.subr.bf16.mxu0 0
    %707 = vmatpush1.bf16.msra.mxu0 %v688
    %708 = vmatprep.subr.bf16.mxu0 0
    %709 = vmatpush1.bf16.msra.mxu0 %v689
    %710 = vmatprep.subr.bf16.mxu0 0
    %711 = vmatpush1.bf16.msra.mxu0 %v690
    %712 = vmatprep.subr.bf16.mxu0 0
    %713 = vmatpush1.bf16.msra.mxu0 %v691
    %714 = vmatprep.subr.bf16.mxu0 0
    %715 = vmatpush1.bf16.msra.mxu0 %v692
    %716 = vmatprep.subr.bf16.mxu0 0
    %717 = vmatpush1.bf16.msra.mxu0 %v693
    %718 = vmatprep.subr.bf16.mxu0 0
    %719 = vmatpush1.bf16.msra.mxu0 0
    %720 = vmatprep.subr.bf16.mxu0 0
    %721 = vmatpush1.bf16.msra.mxu0 0
    %722 = vmatprep.subr.bf16.mxu0 0
    %723 = vmatpush1.bf16.msra.mxu0 0
    %724 = vmatprep.subr.bf16.mxu0 0
    %725 = vmatpush1.bf16.msra.mxu0 0
    %726 = vmatprep.subr.bf16.mxu0 0
    %727 = vmatpush1.bf16.msra.mxu0 0
    %728 = vmatprep.subr.bf16.mxu0 0
    %729 = vmatpush1.bf16.msra.mxu0 0
    %730 = vmatprep.subr.bf16.mxu0 0
    %731 = vmatpush1.bf16.msra.mxu0 0
    %732 = vmatprep.subr.bf16.mxu0 0
    %733 = vmatpush1.bf16.msra.mxu0 0
    %734 = vmatprep.mubr.bf16.mxu0 0
    %735 = vmatmul.mubr.bf16.gmra.mrb[0].mxu0 %v653
    %v736 = vpop.f32.mrb[0].mxu0
    %v737 = vadd.f32 %v202, %v736
    %v738 = vpop.f32.mrb[0].mxu0
    %v739 = vpop.f32.mrb[0].mxu0
    %v740 = vadd.f32 %v202, %v739
    %v741 = vpop.f32.mrb[0].mxu0
    %742 = vdwg.mxu0
    %v743 = vlaneseq
    %v744 = vand.u32 %v743, 127
    %vm745 = vcmp.ge.s32.totalorder %v744, 64
    %vm746 = vcmp.lt.s32.totalorder %v744, 96
    %vm747 = vmand %vm745, %vm746
    %v748 = vsel %vm747, 1.0, 0.5
    %v749 = vsel %vm747, 0.0, 0.5
    %750 = vst [vmem:[#allocation2] sm:$0xf] 0.0
    %v751 = vtanh.pop %v737
    %v752 = vmul.f32 %v751, %v748
    %v753 = vadd.f32 %v752, %v749
    %v754 = vmul.f32 %v753, 0.0
    %756 = vrot.lane.b32.xlu0 %v753, 64
    %v757 = vpop.permute.xlu0 %756
    %v759 = vmul.f32 %v753, %v757
    %761 = vrot.lane.b32.xlu0 %v759, 32
    %v762 = vpop.permute.xlu0 %761
    %v764 = vadd.f32 %v754, %v762
    %v765 = vtanh.pop %v764
    %767 = vrot.lane.b32.xlu0 %v765, 64
    %v768 = vpop.permute.xlu0 %767
    %v770 = vmul.f32 %v753, %v768
    %772 = vrot.lane.b32.xlu0 %v770, 32
    %v773 = vpop.permute.xlu0 %772
    %vm774 = vcmask 261120
    %v775 = vsel %vm774, %v773, 0
    %777 = vmatprep.subr.mxu0 0.0
    %778 = vmatpush1.msra.mxu0 %v192
    %779 = vmatprep.subr.mxu0 0.0
    %780 = vmatpush1.msra.mxu0 %v193
    %781 = vmatprep.subr.mxu0 0.0
    %782 = vmatpush1.msra.mxu0 %v194
    %783 = vmatprep.subr.mxu0 0.0
    %784 = vmatpush1.msra.mxu0 %v195
    %785 = vmatprep.subr.mxu0 0.0
    %786 = vmatpush1.msra.mxu0 0.0
    %787 = vmatprep.subr.mxu0 0.0
    %788 = vmatpush1.msra.mxu0 0.0
    %789 = vmatprep.subr.mxu0 0.0
    %790 = vmatpush1.msra.mxu0 0.0
    %791 = vmatprep.subr.mxu0 0.0
    %792 = vmatpush1.msra.mxu0 0.0
    %793 = vmatprep.subr.mxu0 0.0
    %794 = vmatpush1.msra.mxu0 0.0
    %795 = vmatprep.subr.mxu0 0.0
    %796 = vmatpush1.msra.mxu0 0.0
    %797 = vmatprep.subr.mxu0 0.0
    %798 = vmatpush1.msra.mxu0 0.0
    %799 = vmatprep.subr.mxu0 0.0
    %800 = vmatpush1.msra.mxu0 0.0
    %801 = vmatprep.subr.mxu0 0.0
    %802 = vmatpush1.msra.mxu0 0.0
    %803 = vmatprep.subr.mxu0 0.0
    %804 = vmatpush1.msra.mxu0 0.0
    %805 = vmatprep.subr.mxu0 0.0
    %806 = vmatpush1.msra.mxu0 0.0
    %807 = vmatprep.subr.mxu0 0.0
    %808 = vmatpush1.msra.mxu0 0.0
    %809 = vmatprep.subr.mxu0 0.0
    %810 = vmatpush1.msra.mxu0 0.0
    %811 = vmatprep.subr.mxu0 0.0
    %812 = vmatpush1.msra.mxu0 0.0
    %813 = vmatprep.subr.mxu0 0.0
    %814 = vmatpush1.msra.mxu0 0.0
    %815 = vmatprep.subr.mxu0 0.0
    %816 = vmatpush1.msra.mxu0 0.0
    %817 = vmatprep.subr.mxu0 0.0
    %818 = vmatpush1.msra.mxu0 0.0
    %819 = vmatprep.subr.mxu0 0.0
    %820 = vmatpush1.msra.mxu0 0.0
    %821 = vmatprep.subr.mxu0 0.0
    %822 = vmatpush1.msra.mxu0 0.0
    %823 = vmatprep.subr.mxu0 0.0
    %824 = vmatpush1.msra.mxu0 0.0
    %825 = vmatprep.subr.mxu0 0.0
    %826 = vmatpush1.msra.mxu0 0.0
    %827 = vmatprep.subr.mxu0 0.0
    %828 = vmatpush1.msra.mxu0 0.0
    %829 = vmatprep.subr.mxu0 0.0
    %830 = vmatpush1.msra.mxu0 0.0
    %831 = vmatprep.subr.mxu0 0.0
    %832 = vmatpush1.msra.mxu0 0.0
    %833 = vmatprep.subr.mxu0 0.0
    %834 = vmatpush1.msra.mxu0 0.0
    %835 = vmatprep.subr.mxu0 0.0
    %836 = vmatpush1.msra.mxu0 0.0
    %837 = vmatprep.subr.mxu0 0.0
    %838 = vmatpush1.msra.mxu0 0.0
    %839 = vmatprep.subr.mxu0 0.0
    %840 = vmatpush1.msra.mxu0 0.0
    %841 = vmatprep.mubr.f32.mxu0 0.0
    %842 = vmatmul.mubr.f32.gmra.mrb[0].mxu0 %v775
    %v843 = vpop.f32.mrb[0].mxu0
    %v844 = vadd.f32 %v201, %v843
    %v845 = vpop.f32.mrb[0].mxu0
    %846 = vdwg.mxu0
    %v847 = vtanh.pop %v844
    %v848 = vmul.f32 %v847, %v748
    %v849 = vadd.f32 %v848, %v749
    %v850 = vmul.f32 %v849, 0.0
    %852 = vrot.lane.b32.xlu0 %v849, 64
    %v853 = vpop.permute.xlu0 %852
    %v855 = vmul.f32 %v849, %v853
    %857 = vrot.lane.b32.xlu0 %v855, 32
    %v858 = vpop.permute.xlu0 %857
    %v860 = vadd.f32 %v850, %v858
    %v861 = vtanh.pop %v860
    %863 = vrot.lane.b32.xlu0 %v861, 64
    %v864 = vpop.permute.xlu0 %863
    %v866 = vmul.f32 %v849, %v864
    %v868 = vunpack.c.l.s4 1983009808
    %v869 = vunpack.c.0.s8 %v868
    %v870 = vlaneseq
    %v871 = vshrl.u32 %v870, 7
    %v872 = vsub.s32 %v869, %v871
    %v873 = vrot.slane %v770, %v872
    %874 = vrot.lane.b32.xlu0 %v873, 32
    %v875 = vpop.permute.xlu0 %874
    %vm877 = vcmask 254976
    %878 = vst.msk [vmem:[#allocation2] sm:$0x3] %vm877, %v875
    %v881 = vunpack.c.l.s4 1983009808
    %v882 = vunpack.c.0.s8 %v881
    %v883 = vlaneseq
    %v884 = vshrl.u32 %v883, 7
    %v885 = vsub.s32 %v882, %v884
    %v886 = vrot.slane %v866, %v885
    %887 = vrot.lane.b32.xlu0 %v886, 32
    %v888 = vpop.permute.xlu0 %887
    %890 = vst.msk [vmem:[#allocation2 + $0x2] sm:$0x3] %vm877, %v888
    %v891 = vld [vmem:[#allocation2] sm:$0xf]
    %v894 = vunpack.c.l.s4 1983009808
    %v895 = vunpack.c.0.s8 %v894
    %v896 = vlaneseq
    %v897 = vshrl.u32 %v896, 7
    %v898 = vsub.s32 %v895, %v897
    %v899 = vrot.slane %v891, %v898
    %v900 = vcombine.high %v899, %v899
    %903 = vmatprep.subr.mxu0 %v129
    %904 = vmatpush1.msra.mxu0 %v128
    %905 = vmatprep.subr.mxu0 %v131
    %906 = vmatpush1.msra.mxu0 %v130
    %907 = vmatprep.subr.mxu0 %v133
    %908 = vmatpush1.msra.mxu0 %v132
    %909 = vmatprep.subr.mxu0 %v135
    %910 = vmatpush1.msra.mxu0 %v134
    %911 = vmatprep.subr.mxu0 %v137
    %912 = vmatpush1.msra.mxu0 %v136
    %913 = vmatprep.subr.mxu0 %v139
    %914 = vmatpush1.msra.mxu0 %v138
    %915 = vmatprep.subr.mxu0 %v141
    %916 = vmatpush1.msra.mxu0 %v140
    %917 = vmatprep.subr.mxu0 %v143
    %918 = vmatpush1.msra.mxu0 %v142
    %919 = vmatprep.subr.mxu0 %v145
    %920 = vmatpush1.msra.mxu0 %v144
    %921 = vmatprep.subr.mxu0 %v147
    %922 = vmatpush1.msra.mxu0 %v146
    %923 = vmatprep.subr.mxu0 %v149
    %924 = vmatpush1.msra.mxu0 %v148
    %925 = vmatprep.subr.mxu0 %v151
    %926 = vmatpush1.msra.mxu0 %v150
    %927 = vmatprep.subr.mxu0 %v153
    %928 = vmatpush1.msra.mxu0 %v152
    %929 = vmatprep.subr.mxu0 %v155
    %930 = vmatpush1.msra.mxu0 %v154
    %931 = vmatprep.subr.mxu0 %v157
    %932 = vmatpush1.msra.mxu0 %v156
    %933 = vmatprep.subr.mxu0 %v159
    %934 = vmatpush1.msra.mxu0 %v158
    %935 = vmatprep.subr.mxu0 %v161
    %936 = vmatpush1.msra.mxu0 %v160
    %937 = vmatprep.subr.mxu0 %v163
    %938 = vmatpush1.msra.mxu0 %v162
    %939 = vmatprep.subr.mxu0 %v165
    %940 = vmatpush1.msra.mxu0 %v164
    %941 = vmatprep.subr.mxu0 %v167
    %942 = vmatpush1.msra.mxu0 %v166
    %943 = vmatprep.subr.mxu0 %v169
    %944 = vmatpush1.msra.mxu0 %v168
    %945 = vmatprep.subr.mxu0 %v171
    %946 = vmatpush1.msra.mxu0 %v170
    %947 = vmatprep.subr.mxu0 %v173
    %948 = vmatpush1.msra.mxu0 %v172
    %949 = vmatprep.subr.mxu0 %v175
    %950 = vmatpush1.msra.mxu0 %v174
    %951 = vmatprep.subr.mxu0 %v177
    %952 = vmatpush1.msra.mxu0 %v176
    %953 = vmatprep.subr.mxu0 %v179
    %954 = vmatpush1.msra.mxu0 %v178
    %955 = vmatprep.subr.mxu0 %v181
    %956 = vmatpush1.msra.mxu0 %v180
    %957 = vmatprep.subr.mxu0 %v183
    %958 = vmatpush1.msra.mxu0 %v182
    %959 = vmatprep.subr.mxu0 %v185
    %960 = vmatpush1.msra.mxu0 %v184
    %961 = vmatprep.subr.mxu0 %v187
    %962 = vmatpush1.msra.mxu0 %v186
    %963 = vmatprep.subr.mxu0 %v189
    %964 = vmatpush1.msra.mxu0 %v188
    %965 = vmatprep.subr.mxu0 %v191
    %966 = vmatpush1.msra.mxu0 %v190
    %967 = vmatprep.mubr.f32.mxu0 %v900
    %968 = vmatmul.mubr.f32.gmra.mrb[0].mxu0 %v899
    %v969 = vpop.f32.mrb[0].mxu0
    %v970 = vadd.f32 0.0, %v969
    %v971 = vpop.f32.mrb[0].mxu0
    %v972 = vadd.f32 0.0, %v971
    %973 = vdwg.mxu0
    %v975 = vrot.slane %v970, 6
    %v977 = vadd.f32 %v737, %v975
    %v978 = vtanh.pop %v977
    %v979 = vmul.f32 %v978, %v748
    %v980 = vadd.f32 %v979, %v749
    %v982 = vrot.slane %v764, 6
    %v984 = vmul.f32 %v980, %v982
    %986 = vrot.lane.b32.xlu0 %v980, 64
    %v987 = vpop.permute.xlu0 %986
    %v989 = vmul.f32 %v980, %v987
    %991 = vrot.lane.b32.xlu0 %v989, 32
    %v992 = vpop.permute.xlu0 %991
    %v994 = vadd.f32 %v984, %v992
    %v995 = vtanh.pop %v994
    %997 = vrot.lane.b32.xlu0 %v995, 64
    %v998 = vpop.permute.xlu0 %997
    %v1000 = vmul.f32 %v980, %v998
    %v1002 = vrot.slane %v1000, 2
    %1003 = vrot.lane.b32.xlu0 %v1002, 32
    %v1004 = vpop.permute.xlu0 %1003
    %v1005 = vsel %vm774, %v1004, 0
    %1007 = vmatprep.subr.mxu0 0.0
    %1008 = vmatpush1.msra.mxu0 %v192
    %1009 = vmatprep.subr.mxu0 0.0
    %1010 = vmatpush1.msra.mxu0 %v193
    %1011 = vmatprep.subr.mxu0 0.0
    %1012 = vmatpush1.msra.mxu0 %v194
    %1013 = vmatprep.subr.mxu0 0.0
    %1014 = vmatpush1.msra.mxu0 %v195
    %1015 = vmatprep.subr.mxu0 0.0
    %1016 = vmatpush1.msra.mxu0 0.0
    %1017 = vmatprep.subr.mxu0 0.0
    %1018 = vmatpush1.msra.mxu0 0.0
    %1019 = vmatprep.subr.mxu0 0.0
    %1020 = vmatpush1.msra.mxu0 0.0
    %1021 = vmatprep.subr.mxu0 0.0
    %1022 = vmatpush1.msra.mxu0 0.0
    %1023 = vmatprep.subr.mxu0 0.0
    %1024 = vmatpush1.msra.mxu0 0.0
    %1025 = vmatprep.subr.mxu0 0.0
    %1026 = vmatpush1.msra.mxu0 0.0
    %1027 = vmatprep.subr.mxu0 0.0
    %1028 = vmatpush1.msra.mxu0 0.0
    %1029 = vmatprep.subr.mxu0 0.0
    %1030 = vmatpush1.msra.mxu0 0.0
    %1031 = vmatprep.subr.mxu0 0.0
    %1032 = vmatpush1.msra.mxu0 0.0
    %1033 = vmatprep.subr.mxu0 0.0
    %1034 = vmatpush1.msra.mxu0 0.0
    %1035 = vmatprep.subr.mxu0 0.0
    %1036 = vmatpush1.msra.mxu0 0.0
    %1037 = vmatprep.subr.mxu0 0.0
    %1038 = vmatpush1.msra.mxu0 0.0
    %1039 = vmatprep.subr.mxu0 0.0
    %1040 = vmatpush1.msra.mxu0 0.0
    %1041 = vmatprep.subr.mxu0 0.0
    %1042 = vmatpush1.msra.mxu0 0.0
    %1043 = vmatprep.subr.mxu0 0.0
    %1044 = vmatpush1.msra.mxu0 0.0
    %1045 = vmatprep.subr.mxu0 0.0
    %1046 = vmatpush1.msra.mxu0 0.0
    %1047 = vmatprep.subr.mxu0 0.0
    %1048 = vmatpush1.msra.mxu0 0.0
    %1049 = vmatprep.subr.mxu0 0.0
    %1050 = vmatpush1.msra.mxu0 0.0
    %1051 = vmatprep.subr.mxu0 0.0
    %1052 = vmatpush1.msra.mxu0 0.0
    %1053 = vmatprep.subr.mxu0 0.0
    %1054 = vmatpush1.msra.mxu0 0.0
    %1055 = vmatprep.subr.mxu0 0.0
    %1056 = vmatpush1.msra.mxu0 0.0
    %1057 = vmatprep.subr.mxu0 0.0
    %1058 = vmatpush1.msra.mxu0 0.0
    %1059 = vmatprep.subr.mxu0 0.0
    %1060 = vmatpush1.msra.mxu0 0.0
    %1061 = vmatprep.subr.mxu0 0.0
    %1062 = vmatpush1.msra.mxu0 0.0
    %1063 = vmatprep.subr.mxu0 0.0
    %1064 = vmatpush1.msra.mxu0 0.0
    %1065 = vmatprep.subr.mxu0 0.0
    %1066 = vmatpush1.msra.mxu0 0.0
    %1067 = vmatprep.subr.mxu0 0.0
    %1068 = vmatpush1.msra.mxu0 0.0
    %1069 = vmatprep.subr.mxu0 0.0
    %1070 = vmatpush1.msra.mxu0 0.0
    %1071 = vmatprep.mubr.f32.mxu0 0.0
    %1072 = vmatmul.mubr.f32.gmra.mrb[0].mxu0 %v1005
    %v1073 = vpop.f32.mrb[0].mxu0
    %v1074 = vadd.f32 %v201, %v1073
    %v1075 = vpop.f32.mrb[0].mxu0
    %1076 = vdwg.mxu0
    %v1077 = vadd.f32 %v1074, %v972
    %v1078 = vtanh.pop %v1077
    %v1079 = vmul.f32 %v1078, %v748
    %v1080 = vadd.f32 %v1079, %v749
    %v1081 = vmul.f32 %v1080, %v860
    %1083 = vrot.lane.b32.xlu0 %v1080, 64
    %v1084 = vpop.permute.xlu0 %1083
    %v1086 = vmul.f32 %v1080, %v1084
    %1088 = vrot.lane.b32.xlu0 %v1086, 32
    %v1089 = vpop.permute.xlu0 %1088
    %v1091 = vadd.f32 %v1081, %v1089
    %v1092 = vtanh.pop %v1091
    %1094 = vrot.lane.b32.xlu0 %v1092, 64
    %v1095 = vpop.permute.xlu0 %1094
    %v1097 = vmul.f32 %v1080, %v1095
    %v1099 = vunpack.c.l.s4 1983009808
    %v1100 = vunpack.c.0.s8 %v1099
    %v1101 = vlaneseq
    %v1102 = vshrl.u32 %v1101, 7
    %v1103 = vsub.s32 %v1100, %v1102
    %v1104 = vrot.slane %v1000, %v1103
    %v1105 = vcombine.high %v1104, %v1104
    %1106 = vrot.lane.b32.xlu0 %v1105, 32
    %v1107 = vpop.permute.xlu0 %1106
    %1109 = vst.msk [vmem:[#allocation2] sm:$0x3] %vm877, %v1107
    %v1112 = vunpack.c.l.s4 1983009808
    %v1113 = vunpack.c.0.s8 %v1112
    %v1114 = vlaneseq
    %v1115 = vshrl.u32 %v1114, 7
    %v1116 = vsub.s32 %v1113, %v1115
    %v1117 = vrot.slane %v1097, %v1116
    %1118 = vrot.lane.b32.xlu0 %v1117, 32
    %v1119 = vpop.permute.xlu0 %1118
    %1121 = vst.msk [vmem:[#allocation2 + $0x2] sm:$0x3] %vm877, %v1119
    %v1122 = vld [vmem:[#allocation2] sm:$0xf]
    %v1125 = vunpack.c.l.s4 1983009808
    %v1126 = vunpack.c.0.s8 %v1125
    %v1127 = vlaneseq
    %v1128 = vshrl.u32 %v1127, 7
    %v1129 = vsub.s32 %v1126, %v1128
    %v1130 = vrot.slane %v1122, %v1129
    %v1131 = vcombine.high %v1130, %v1130
    %1134 = vmatprep.subr.mxu0 %v129
    %1135 = vmatpush1.msra.mxu0 %v128
    %1136 = vmatprep.subr.mxu0 %v131
    %1137 = vmatpush1.msra.mxu0 %v130
    %1138 = vmatprep.subr.mxu0 %v133
    %1139 = vmatpush1.msra.mxu0 %v132
    %1140 = vmatprep.subr.mxu0 %v135
    %1141 = vmatpush1.msra.mxu0 %v134
    %1142 = vmatprep.subr.mxu0 %v137
    %1143 = vmatpush1.msra.mxu0 %v136
    %1144 = vmatprep.subr.mxu0 %v139
    %1145 = vmatpush1.msra.mxu0 %v138
    %1146 = vmatprep.subr.mxu0 %v141
    %1147 = vmatpush1.msra.mxu0 %v140
    %1148 = vmatprep.subr.mxu0 %v143
    %1149 = vmatpush1.msra.mxu0 %v142
    %1150 = vmatprep.subr.mxu0 %v145
    %1151 = vmatpush1.msra.mxu0 %v144
    %1152 = vmatprep.subr.mxu0 %v147
    %1153 = vmatpush1.msra.mxu0 %v146
    %1154 = vmatprep.subr.mxu0 %v149
    %1155 = vmatpush1.msra.mxu0 %v148
    %1156 = vmatprep.subr.mxu0 %v151
    %1157 = vmatpush1.msra.mxu0 %v150
    %1158 = vmatprep.subr.mxu0 %v153
    %1159 = vmatpush1.msra.mxu0 %v152
    %1160 = vmatprep.subr.mxu0 %v155
    %1161 = vmatpush1.msra.mxu0 %v154
    %1162 = vmatprep.subr.mxu0 %v157
    %1163 = vmatpush1.msra.mxu0 %v156
    %1164 = vmatprep.subr.mxu0 %v159
    %1165 = vmatpush1.msra.mxu0 %v158
    %1166 = vmatprep.subr.mxu0 %v161
    %1167 = vmatpush1.msra.mxu0 %v160
    %1168 = vmatprep.subr.mxu0 %v163
    %1169 = vmatpush1.msra.mxu0 %v162
    %1170 = vmatprep.subr.mxu0 %v165
    %1171 = vmatpush1.msra.mxu0 %v164
    %1172 = vmatprep.subr.mxu0 %v167
    %1173 = vmatpush1.msra.mxu0 %v166
    %1174 = vmatprep.subr.mxu0 %v169
    %1175 = vmatpush1.msra.mxu0 %v168
    %1176 = vmatprep.subr.mxu0 %v171
    %1177 = vmatpush1.msra.mxu0 %v170
    %1178 = vmatprep.subr.mxu0 %v173
    %1179 = vmatpush1.msra.mxu0 %v172
    %1180 = vmatprep.subr.mxu0 %v175
    %1181 = vmatpush1.msra.mxu0 %v174
    %1182 = vmatprep.subr.mxu0 %v177
    %1183 = vmatpush1.msra.mxu0 %v176
    %1184 = vmatprep.subr.mxu0 %v179
    %1185 = vmatpush1.msra.mxu0 %v178
    %1186 = vmatprep.subr.mxu0 %v181
    %1187 = vmatpush1.msra.mxu0 %v180
    %1188 = vmatprep.subr.mxu0 %v183
    %1189 = vmatpush1.msra.mxu0 %v182
    %1190 = vmatprep.subr.mxu0 %v185
    %1191 = vmatpush1.msra.mxu0 %v184
    %1192 = vmatprep.subr.mxu0 %v187
    %1193 = vmatpush1.msra.mxu0 %v186
    %1194 = vmatprep.subr.mxu0 %v189
    %1195 = vmatpush1.msra.mxu0 %v188
    %1196 = vmatprep.subr.mxu0 %v191
    %1197 = vmatpush1.msra.mxu0 %v190
    %1198 = vmatprep.mubr.f32.mxu0 %v1131
    %1199 = vmatmul.mubr.f32.gmra.mrb[0].mxu0 %v1130
    %v1200 = vpop.f32.mrb[0].mxu0
    %v1201 = vadd.f32 0.0, %v1200
    %v1202 = vpop.f32.mrb[0].mxu0
    %v1203 = vadd.f32 0.0, %v1202
    %1204 = vdwg.mxu0
    %v1206 = vrot.slane %v1201, 4
    %v1208 = vadd.f32 %v737, %v1206
    %v1209 = vtanh.pop %v1208
    %v1210 = vmul.f32 %v1209, %v748
    %v1211 = vadd.f32 %v1210, %v749
    %v1213 = vrot.slane %v994, 6
    %v1215 = vmul.f32 %v1211, %v1213
    %1217 = vrot.lane.b32.xlu0 %v1211, 64
    %v1218 = vpop.permute.xlu0 %1217
    %v1220 = vmul.f32 %v1211, %v1218
    %1222 = vrot.lane.b32.xlu0 %v1220, 32
    %v1223 = vpop.permute.xlu0 %1222
    %v1225 = vadd.f32 %v1215, %v1223
    %v1226 = vtanh.pop %v1225
    %1228 = vrot.lane.b32.xlu0 %v1226, 64
    %v1229 = vpop.permute.xlu0 %1228
    %v1231 = vmul.f32 %v1211, %v1229
    %v1233 = vrot.slane %v1231, 4
    %1234 = vrot.lane.b32.xlu0 %v1233, 32
    %v1235 = vpop.permute.xlu0 %1234
    %v1236 = vsel %vm774, %v1235, 0
    %1238 = vmatprep.subr.mxu0 0.0
    %1239 = vmatpush1.msra.mxu0 %v192
    %1240 = vmatprep.subr.mxu0 0.0
    %1241 = vmatpush1.msra.mxu0 %v193
    %1242 = vmatprep.subr.mxu0 0.0
    %1243 = vmatpush1.msra.mxu0 %v194
    %1244 = vmatprep.subr.mxu0 0.0
    %1245 = vmatpush1.msra.mxu0 %v195
    %1246 = vmatprep.subr.mxu0 0.0
    %1247 = vmatpush1.msra.mxu0 0.0
    %1248 = vmatprep.subr.mxu0 0.0
    %1249 = vmatpush1.msra.mxu0 0.0
    %1250 = vmatprep.subr.mxu0 0.0
    %1251 = vmatpush1.msra.mxu0 0.0
    %1252 = vmatprep.subr.mxu0 0.0
    %1253 = vmatpush1.msra.mxu0 0.0
    %1254 = vmatprep.subr.mxu0 0.0
    %1255 = vmatpush1.msra.mxu0 0.0
    %1256 = vmatprep.subr.mxu0 0.0
    %1257 = vmatpush1.msra.mxu0 0.0
    %1258 = vmatprep.subr.mxu0 0.0
    %1259 = vmatpush1.msra.mxu0 0.0
    %1260 = vmatprep.subr.mxu0 0.0
    %1261 = vmatpush1.msra.mxu0 0.0
    %1262 = vmatprep.subr.mxu0 0.0
    %1263 = vmatpush1.msra.mxu0 0.0
    %1264 = vmatprep.subr.mxu0 0.0
    %1265 = vmatpush1.msra.mxu0 0.0
    %1266 = vmatprep.subr.mxu0 0.0
    %1267 = vmatpush1.msra.mxu0 0.0
    %1268 = vmatprep.subr.mxu0 0.0
    %1269 = vmatpush1.msra.mxu0 0.0
    %1270 = vmatprep.subr.mxu0 0.0
    %1271 = vmatpush1.msra.mxu0 0.0
    %1272 = vmatprep.subr.mxu0 0.0
    %1273 = vmatpush1.msra.mxu0 0.0
    %1274 = vmatprep.subr.mxu0 0.0
    %1275 = vmatpush1.msra.mxu0 0.0
    %1276 = vmatprep.subr.mxu0 0.0
    %1277 = vmatpush1.msra.mxu0 0.0
    %1278 = vmatprep.subr.mxu0 0.0
    %1279 = vmatpush1.msra.mxu0 0.0
    %1280 = vmatprep.subr.mxu0 0.0
    %1281 = vmatpush1.msra.mxu0 0.0
    %1282 = vmatprep.subr.mxu0 0.0
    %1283 = vmatpush1.msra.mxu0 0.0
    %1284 = vmatprep.subr.mxu0 0.0
    %1285 = vmatpush1.msra.mxu0 0.0
    %1286 = vmatprep.subr.mxu0 0.0
    %1287 = vmatpush1.msra.mxu0 0.0
    %1288 = vmatprep.subr.mxu0 0.0
    %1289 = vmatpush1.msra.mxu0 0.0
    %1290 = vmatprep.subr.mxu0 0.0
    %1291 = vmatpush1.msra.mxu0 0.0
    %1292 = vmatprep.subr.mxu0 0.0
    %1293 = vmatpush1.msra.mxu0 0.0
    %1294 = vmatprep.subr.mxu0 0.0
    %1295 = vmatpush1.msra.mxu0 0.0
    %1296 = vmatprep.subr.mxu0 0.0
    %1297 = vmatpush1.msra.mxu0 0.0
    %1298 = vmatprep.subr.mxu0 0.0
    %1299 = vmatpush1.msra.mxu0 0.0
    %1300 = vmatprep.subr.mxu0 0.0
    %1301 = vmatpush1.msra.mxu0 0.0
    %1302 = vmatprep.mubr.f32.mxu0 0.0
    %1303 = vmatmul.mubr.f32.gmra.mrb[0].mxu0 %v1236
    %v1304 = vpop.f32.mrb[0].mxu0
    %v1305 = vadd.f32 %v201, %v1304
    %v1306 = vpop.f32.mrb[0].mxu0
    %1307 = vdwg.mxu0
    %v1308 = vadd.f32 %v1305, %v1203
    %v1309 = vtanh.pop %v1308
    %v1310 = vmul.f32 %v1309, %v748
    %v1311 = vadd.f32 %v1310, %v749
    %v1312 = vmul.f32 %v1311, %v1091
    %1314 = vrot.lane.b32.xlu0 %v1311, 64
    %v1315 = vpop.permute.xlu0 %1314
    %v1317 = vmul.f32 %v1311, %v1315
    %1319 = vrot.lane.b32.xlu0 %v1317, 32
    %v1320 = vpop.permute.xlu0 %1319
    %v1322 = vadd.f32 %v1312, %v1320
    %v1323 = vtanh.pop %v1322
    %1325 = vrot.lane.b32.xlu0 %v1323, 64
    %v1326 = vpop.permute.xlu0 %1325
    %v1328 = vmul.f32 %v1311, %v1326
    %v1329 = vcombine.high %v1231, %v1231
    %v1331 = vunpack.c.l.s4 1983009808
    %v1332 = vunpack.c.0.s8 %v1331
    %v1333 = vlaneseq
    %v1334 = vshrl.u32 %v1333, 7
    %v1335 = vsub.s32 %v1332, %v1334
    %v1336 = vrot.slane %v1329, %v1335
    %1337 = vrot.lane.b32.xlu0 %v1336, 32
    %v1338 = vpop.permute.xlu0 %1337
    %1340 = vst.msk [vmem:[#allocation2] sm:$0x3] %vm877, %v1338
    %v1343 = vunpack.c.l.s4 1983009808
    %v1344 = vunpack.c.0.s8 %v1343
    %v1345 = vlaneseq
    %v1346 = vshrl.u32 %v1345, 7
    %v1347 = vsub.s32 %v1344, %v1346
    %v1348 = vrot.slane %v1328, %v1347
    %1349 = vrot.lane.b32.xlu0 %v1348, 32
    %v1350 = vpop.permute.xlu0 %1349
    %1352 = vst.msk [vmem:[#allocation2 + $0x2] sm:$0x3] %vm877, %v1350
    %v1353 = vld [vmem:[#allocation2] sm:$0xf]
    %v1356 = vunpack.c.l.s4 1983009808
    %v1357 = vunpack.c.0.s8 %v1356
    %v1358 = vlaneseq
    %v1359 = vshrl.u32 %v1358, 7
    %v1360 = vsub.s32 %v1357, %v1359
    %v1361 = vrot.slane %v1353, %v1360
    %v1362 = vcombine.high %v1361, %v1361
    %1365 = vmatprep.subr.mxu0 %v129
    %1366 = vmatpush1.msra.mxu0 %v128
    %1367 = vmatprep.subr.mxu0 %v131
    %1368 = vmatpush1.msra.mxu0 %v130
    %1369 = vmatprep.subr.mxu0 %v133
    %1370 = vmatpush1.msra.mxu0 %v132
    %1371 = vmatprep.subr.mxu0 %v135
    %1372 = vmatpush1.msra.mxu0 %v134
    %1373 = vmatprep.subr.mxu0 %v137
    %1374 = vmatpush1.msra.mxu0 %v136
    %1375 = vmatprep.subr.mxu0 %v139
    %1376 = vmatpush1.msra.mxu0 %v138
    %1377 = vmatprep.subr.mxu0 %v141
    %1378 = vmatpush1.msra.mxu0 %v140
    %1379 = vmatprep.subr.mxu0 %v143
    %1380 = vmatpush1.msra.mxu0 %v142
    %1381 = vmatprep.subr.mxu0 %v145
    %1382 = vmatpush1.msra.mxu0 %v144
    %1383 = vmatprep.subr.mxu0 %v147
    %1384 = vmatpush1.msra.mxu0 %v146
    %1385 = vmatprep.subr.mxu0 %v149
    %1386 = vmatpush1.msra.mxu0 %v148
    %1387 = vmatprep.subr.mxu0 %v151
    %1388 = vmatpush1.msra.mxu0 %v150
    %1389 = vmatprep.subr.mxu0 %v153
    %1390 = vmatpush1.msra.mxu0 %v152
    %1391 = vmatprep.subr.mxu0 %v155
    %1392 = vmatpush1.msra.mxu0 %v154
    %1393 = vmatprep.subr.mxu0 %v157
    %1394 = vmatpush1.msra.mxu0 %v156
    %1395 = vmatprep.subr.mxu0 %v159
    %1396 = vmatpush1.msra.mxu0 %v158
    %1397 = vmatprep.subr.mxu0 %v161
    %1398 = vmatpush1.msra.mxu0 %v160
    %1399 = vmatprep.subr.mxu0 %v163
    %1400 = vmatpush1.msra.mxu0 %v162
    %1401 = vmatprep.subr.mxu0 %v165
    %1402 = vmatpush1.msra.mxu0 %v164
    %1403 = vmatprep.subr.mxu0 %v167
    %1404 = vmatpush1.msra.mxu0 %v166
    %1405 = vmatprep.subr.mxu0 %v169
    %1406 = vmatpush1.msra.mxu0 %v168
    %1407 = vmatprep.subr.mxu0 %v171
    %1408 = vmatpush1.msra.mxu0 %v170
    %1409 = vmatprep.subr.mxu0 %v173
    %1410 = vmatpush1.msra.mxu0 %v172
    %1411 = vmatprep.subr.mxu0 %v175
    %1412 = vmatpush1.msra.mxu0 %v174
    %1413 = vmatprep.subr.mxu0 %v177
    %1414 = vmatpush1.msra.mxu0 %v176
    %1415 = vmatprep.subr.mxu0 %v179
    %1416 = vmatpush1.msra.mxu0 %v178
    %1417 = vmatprep.subr.mxu0 %v181
    %1418 = vmatpush1.msra.mxu0 %v180
    %1419 = vmatprep.subr.mxu0 %v183
    %1420 = vmatpush1.msra.mxu0 %v182
    %1421 = vmatprep.subr.mxu0 %v185
    %1422 = vmatpush1.msra.mxu0 %v184
    %1423 = vmatprep.subr.mxu0 %v187
    %1424 = vmatpush1.msra.mxu0 %v186
    %1425 = vmatprep.subr.mxu0 %v189
    %1426 = vmatpush1.msra.mxu0 %v188
    %1427 = vmatprep.subr.mxu0 %v191
    %1428 = vmatpush1.msra.mxu0 %v190
    %1429 = vmatprep.mubr.f32.mxu0 %v1362
    %1430 = vmatmul.mubr.f32.gmra.mrb[0].mxu0 %v1361
    %v1431 = vpop.f32.mrb[0].mxu0
    %v1432 = vadd.f32 0.0, %v1431
    %v1433 = vpop.f32.mrb[0].mxu0
    %v1434 = vadd.f32 0.0, %v1433
    %1435 = vdwg.mxu0
    %v1437 = vrot.slane %v1432, 2
    %v1439 = vadd.f32 %v737, %v1437
    %v1440 = vtanh.pop %v1439
    %v1441 = vmul.f32 %v1440, %v748
    %v1442 = vadd.f32 %v1441, %v749
    %v1444 = vrot.slane %v1225, 6
    %v1446 = vmul.f32 %v1442, %v1444
    %1448 = vrot.lane.b32.xlu0 %v1442, 64
    %v1449 = vpop.permute.xlu0 %1448
    %v1451 = vmul.f32 %v1442, %v1449
    %1453 = vrot.lane.b32.xlu0 %v1451, 32
    %v1454 = vpop.permute.xlu0 %1453
    %v1456 = vadd.f32 %v1446, %v1454
    %v1457 = vtanh.pop %v1456
    %1459 = vrot.lane.b32.xlu0 %v1457, 64
    %v1460 = vpop.permute.xlu0 %1459
    %v1462 = vmul.f32 %v1442, %v1460
    %v1464 = vrot.slane %v1462, 6
    %1465 = vrot.lane.b32.xlu0 %v1464, 32
    %v1466 = vpop.permute.xlu0 %1465
    %v1467 = vsel %vm774, %v1466, 0
    %1469 = vmatprep.subr.mxu0 0.0
    %1470 = vmatpush1.msra.mxu0 %v192
    %1471 = vmatprep.subr.mxu0 0.0
    %1472 = vmatpush1.msra.mxu0 %v193
    %1473 = vmatprep.subr.mxu0 0.0
    %1474 = vmatpush1.msra.mxu0 %v194
    %1475 = vmatprep.subr.mxu0 0.0
    %1476 = vmatpush1.msra.mxu0 %v195
    %1477 = vmatprep.subr.mxu0 0.0
    %1478 = vmatpush1.msra.mxu0 0.0
    %1479 = vmatprep.subr.mxu0 0.0
    %1480 = vmatpush1.msra.mxu0 0.0
    %1481 = vmatprep.subr.mxu0 0.0
    %1482 = vmatpush1.msra.mxu0 0.0
    %1483 = vmatprep.subr.mxu0 0.0
    %1484 = vmatpush1.msra.mxu0 0.0
    %1485 = vmatprep.subr.mxu0 0.0
    %1486 = vmatpush1.msra.mxu0 0.0
    %1487 = vmatprep.subr.mxu0 0.0
    %1488 = vmatpush1.msra.mxu0 0.0
    %1489 = vmatprep.subr.mxu0 0.0
    %1490 = vmatpush1.msra.mxu0 0.0
    %1491 = vmatprep.subr.mxu0 0.0
    %1492 = vmatpush1.msra.mxu0 0.0
    %1493 = vmatprep.subr.mxu0 0.0
    %1494 = vmatpush1.msra.mxu0 0.0
    %1495 = vmatprep.subr.mxu0 0.0
    %1496 = vmatpush1.msra.mxu0 0.0
    %1497 = vmatprep.subr.mxu0 0.0
    %1498 = vmatpush1.msra.mxu0 0.0
    %1499 = vmatprep.subr.mxu0 0.0
    %1500 = vmatpush1.msra.mxu0 0.0
    %1501 = vmatprep.subr.mxu0 0.0
    %1502 = vmatpush1.msra.mxu0 0.0
    %1503 = vmatprep.subr.mxu0 0.0
    %1504 = vmatpush1.msra.mxu0 0.0
    %1505 = vmatprep.subr.mxu0 0.0
    %1506 = vmatpush1.msra.mxu0 0.0
    %1507 = vmatprep.subr.mxu0 0.0
    %1508 = vmatpush1.msra.mxu0 0.0
    %1509 = vmatprep.subr.mxu0 0.0
    %1510 = vmatpush1.msra.mxu0 0.0
    %1511 = vmatprep.subr.mxu0 0.0
    %1512 = vmatpush1.msra.mxu0 0.0
    %1513 = vmatprep.subr.mxu0 0.0
    %1514 = vmatpush1.msra.mxu0 0.0
    %1515 = vmatprep.subr.mxu0 0.0
    %1516 = vmatpush1.msra.mxu0 0.0
    %1517 = vmatprep.subr.mxu0 0.0
    %1518 = vmatpush1.msra.mxu0 0.0
    %1519 = vmatprep.subr.mxu0 0.0
    %1520 = vmatpush1.msra.mxu0 0.0
    %1521 = vmatprep.subr.mxu0 0.0
    %1522 = vmatpush1.msra.mxu0 0.0
    %1523 = vmatprep.subr.mxu0 0.0
    %1524 = vmatpush1.msra.mxu0 0.0
    %1525 = vmatprep.subr.mxu0 0.0
    %1526 = vmatpush1.msra.mxu0 0.0
    %1527 = vmatprep.subr.mxu0 0.0
    %1528 = vmatpush1.msra.mxu0 0.0
    %1529 = vmatprep.subr.mxu0 0.0
    %1530 = vmatpush1.msra.mxu0 0.0
    %1531 = vmatprep.subr.mxu0 0.0
    %1532 = vmatpush1.msra.mxu0 0.0
    %1533 = vmatprep.mubr.f32.mxu0 0.0
    %1534 = vmatmul.mubr.f32.gmra.mrb[0].mxu0 %v1467
    %v1535 = vpop.f32.mrb[0].mxu0
    %v1536 = vadd.f32 %v201, %v1535
    %v1537 = vpop.f32.mrb[0].mxu0
    %1538 = vdwg.mxu0
    %v1539 = vadd.f32 %v1536, %v1434
    %v1540 = vtanh.pop %v1539
    %v1541 = vmul.f32 %v1540, %v748
    %v1542 = vadd.f32 %v1541, %v749
    %v1543 = vmul.f32 %v1542, %v1322
    %1545 = vrot.lane.b32.xlu0 %v1542, 64
    %v1546 = vpop.permute.xlu0 %1545
    %v1548 = vmul.f32 %v1542, %v1546
    %1550 = vrot.lane.b32.xlu0 %v1548, 32
    %v1551 = vpop.permute.xlu0 %1550
    %v1553 = vadd.f32 %v1543, %v1551
    %v1554 = vtanh.pop %v1553
    %1556 = vrot.lane.b32.xlu0 %v1554, 64
    %v1557 = vpop.permute.xlu0 %1556
    %v1559 = vmul.f32 %v1542, %v1557
    %v1560 = vcombine.high %v1462, %v1462
    %v1562 = vunpack.c.l.s4 1983009808
    %v1563 = vunpack.c.0.s8 %v1562
    %v1564 = vlaneseq
    %v1565 = vshrl.u32 %v1564, 7
    %v1566 = vsub.s32 %v1563, %v1565
    %v1567 = vrot.slane %v1560, %v1566
    %v1568 = vcombine.high %v1567, %v1567
    %1569 = vrot.lane.b32.xlu0 %v1568, 32
    %v1570 = vpop.permute.xlu0 %1569
    %1572 = vst.msk [vmem:[#allocation2] sm:$0x3] %vm877, %v1570
    %v1575 = vunpack.c.l.s4 1983009808
    %v1576 = vunpack.c.0.s8 %v1575
    %v1577 = vlaneseq
    %v1578 = vshrl.u32 %v1577, 7
    %v1579 = vsub.s32 %v1576, %v1578
    %v1580 = vrot.slane %v1559, %v1579
    %1581 = vrot.lane.b32.xlu0 %v1580, 32
    %v1582 = vpop.permute.xlu0 %1581
    %1584 = vst.msk [vmem:[#allocation2 + $0x2] sm:$0x3] %vm877, %v1582
    %v1585 = vld [vmem:[#allocation2] sm:$0xf]
    %v1588 = vunpack.c.l.s4 1983009808
    %v1589 = vunpack.c.0.s8 %v1588
    %v1590 = vlaneseq
    %v1591 = vshrl.u32 %v1590, 7
    %v1592 = vsub.s32 %v1589, %v1591
    %v1593 = vrot.slane %v1585, %v1592
    %v1594 = vcombine.high %v1593, %v1593
    %1597 = vmatprep.subr.mxu0 %v129
    %1598 = vmatpush1.msra.mxu0 %v128
    %1599 = vmatprep.subr.mxu0 %v131
    %1600 = vmatpush1.msra.mxu0 %v130
    %1601 = vmatprep.subr.mxu0 %v133
    %1602 = vmatpush1.msra.mxu0 %v132
    %1603 = vmatprep.subr.mxu0 %v135
    %1604 = vmatpush1.msra.mxu0 %v134
    %1605 = vmatprep.subr.mxu0 %v137
    %1606 = vmatpush1.msra.mxu0 %v136
    %1607 = vmatprep.subr.mxu0 %v139
    %1608 = vmatpush1.msra.mxu0 %v138
    %1609 = vmatprep.subr.mxu0 %v141
    %1610 = vmatpush1.msra.mxu0 %v140
    %1611 = vmatprep.subr.mxu0 %v143
    %1612 = vmatpush1.msra.mxu0 %v142
    %1613 = vmatprep.subr.mxu0 %v145
    %1614 = vmatpush1.msra.mxu0 %v144
    %1615 = vmatprep.subr.mxu0 %v147
    %1616 = vmatpush1.msra.mxu0 %v146
    %1617 = vmatprep.subr.mxu0 %v149
    %1618 = vmatpush1.msra.mxu0 %v148
    %1619 = vmatprep.subr.mxu0 %v151
    %1620 = vmatpush1.msra.mxu0 %v150
    %1621 = vmatprep.subr.mxu0 %v153
    %1622 = vmatpush1.msra.mxu0 %v152
    %1623 = vmatprep.subr.mxu0 %v155
    %1624 = vmatpush1.msra.mxu0 %v154
    %1625 = vmatprep.subr.mxu0 %v157
    %1626 = vmatpush1.msra.mxu0 %v156
    %1627 = vmatprep.subr.mxu0 %v159
    %1628 = vmatpush1.msra.mxu0 %v158
    %1629 = vmatprep.subr.mxu0 %v161
    %1630 = vmatpush1.msra.mxu0 %v160
    %1631 = vmatprep.subr.mxu0 %v163
    %1632 = vmatpush1.msra.mxu0 %v162
    %1633 = vmatprep.subr.mxu0 %v165
    %1634 = vmatpush1.msra.mxu0 %v164
    %1635 = vmatprep.subr.mxu0 %v167
    %1636 = vmatpush1.msra.mxu0 %v166
    %1637 = vmatprep.subr.mxu0 %v169
    %1638 = vmatpush1.msra.mxu0 %v168
    %1639 = vmatprep.subr.mxu0 %v171
    %1640 = vmatpush1.msra.mxu0 %v170
    %1641 = vmatprep.subr.mxu0 %v173
    %1642 = vmatpush1.msra.mxu0 %v172
    %1643 = vmatprep.subr.mxu0 %v175
    %1644 = vmatpush1.msra.mxu0 %v174
    %1645 = vmatprep.subr.mxu0 %v177
    %1646 = vmatpush1.msra.mxu0 %v176
    %1647 = vmatprep.subr.mxu0 %v179
    %1648 = vmatpush1.msra.mxu0 %v178
    %1649 = vmatprep.subr.mxu0 %v181
    %1650 = vmatpush1.msra.mxu0 %v180
    %1651 = vmatprep.subr.mxu0 %v183
    %1652 = vmatpush1.msra.mxu0 %v182
    %1653 = vmatprep.subr.mxu0 %v185
    %1654 = vmatpush1.msra.mxu0 %v184
    %1655 = vmatprep.subr.mxu0 %v187
    %1656 = vmatpush1.msra.mxu0 %v186
    %1657 = vmatprep.subr.mxu0 %v189
    %1658 = vmatpush1.msra.mxu0 %v188
    %1659 = vmatprep.subr.mxu0 %v191
    %1660 = vmatpush1.msra.mxu0 %v190
    %1661 = vmatprep.mubr.f32.mxu0 %v1594
    %1662 = vmatmul.mubr.f32.gmra.mrb[0].mxu0 %v1593
    %v1663 = vpop.f32.mrb[0].mxu0
    %v1664 = vadd.f32 0.0, %v1663
    %v1665 = vpop.f32.mrb[0].mxu0
    %v1666 = vadd.f32 0.0, %v1665
    %1667 = vdwg.mxu0
    %v1668 = vadd.f32 %v740, %v1664
    %v1669 = vtanh.pop %v1668
    %v1670 = vmul.f32 %v1669, %v748
    %v1671 = vadd.f32 %v1670, %v749
    %v1673 = vrot.slane %v1456, 6
    %v1675 = vmul.f32 %v1671, %v1673
    %1677 = vrot.lane.b32.xlu0 %v1671, 64
    %v1678 = vpop.permute.xlu0 %1677
    %v1680 = vmul.f32 %v1671, %v1678
    %1682 = vrot.lane.b32.xlu0 %v1680, 32
    %v1683 = vpop.permute.xlu0 %1682
    %v1685 = vadd.f32 %v1675, %v1683
    %v1686 = vtanh.pop %v1685
    %1688 = vrot.lane.b32.xlu0 %v1686, 64
    %v1689 = vpop.permute.xlu0 %1688
    %v1691 = vmul.f32 %v1671, %v1689
    %1693 = vrot.lane.b32.xlu0 %v1691, 32
    %v1694 = vpop.permute.xlu0 %1693
    %v1695 = vsel %vm774, %v1694, 0
    %1697 = vmatprep.subr.mxu0 0.0
    %1698 = vmatpush1.msra.mxu0 %v192
    %1699 = vmatprep.subr.mxu0 0.0
    %1700 = vmatpush1.msra.mxu0 %v193
    %1701 = vmatprep.subr.mxu0 0.0
    %1702 = vmatpush1.msra.mxu0 %v194
    %1703 = vmatprep.subr.mxu0 0.0
    %1704 = vmatpush1.msra.mxu0 %v195
    %1705 = vmatprep.subr.mxu0 0.0
    %1706 = vmatpush1.msra.mxu0 0.0
    %1707 = vmatprep.subr.mxu0 0.0
    %1708 = vmatpush1.msra.mxu0 0.0
    %1709 = vmatprep.subr.mxu0 0.0
    %1710 = vmatpush1.msra.mxu0 0.0
    %1711 = vmatprep.subr.mxu0 0.0
    %1712 = vmatpush1.msra.mxu0 0.0
    %1713 = vmatprep.subr.mxu0 0.0
    %1714 = vmatpush1.msra.mxu0 0.0
    %1715 = vmatprep.subr.mxu0 0.0
    %1716 = vmatpush1.msra.mxu0 0.0
    %1717 = vmatprep.subr.mxu0 0.0
    %1718 = vmatpush1.msra.mxu0 0.0
    %1719 = vmatprep.subr.mxu0 0.0
    %1720 = vmatpush1.msra.mxu0 0.0
    %1721 = vmatprep.subr.mxu0 0.0
    %1722 = vmatpush1.msra.mxu0 0.0
    %1723 = vmatprep.subr.mxu0 0.0
    %1724 = vmatpush1.msra.mxu0 0.0
    %1725 = vmatprep.subr.mxu0 0.0
    %1726 = vmatpush1.msra.mxu0 0.0
    %1727 = vmatprep.subr.mxu0 0.0
    %1728 = vmatpush1.msra.mxu0 0.0
    %1729 = vmatprep.subr.mxu0 0.0
    %1730 = vmatpush1.msra.mxu0 0.0
    %1731 = vmatprep.subr.mxu0 0.0
    %1732 = vmatpush1.msra.mxu0 0.0
    %1733 = vmatprep.subr.mxu0 0.0
    %1734 = vmatpush1.msra.mxu0 0.0
    %1735 = vmatprep.subr.mxu0 0.0
    %1736 = vmatpush1.msra.mxu0 0.0
    %1737 = vmatprep.subr.mxu0 0.0
    %1738 = vmatpush1.msra.mxu0 0.0
    %1739 = vmatprep.subr.mxu0 0.0
    %1740 = vmatpush1.msra.mxu0 0.0
    %1741 = vmatprep.subr.mxu0 0.0
    %1742 = vmatpush1.msra.mxu0 0.0
    %1743 = vmatprep.subr.mxu0 0.0
    %1744 = vmatpush1.msra.mxu0 0.0
    %1745 = vmatprep.subr.mxu0 0.0
    %1746 = vmatpush1.msra.mxu0 0.0
    %1747 = vmatprep.subr.mxu0 0.0
    %1748 = vmatpush1.msra.mxu0 0.0
    %1749 = vmatprep.subr.mxu0 0.0
    %1750 = vmatpush1.msra.mxu0 0.0
    %1751 = vmatprep.subr.mxu0 0.0
    %1752 = vmatpush1.msra.mxu0 0.0
    %1753 = vmatprep.subr.mxu0 0.0
    %1754 = vmatpush1.msra.mxu0 0.0
    %1755 = vmatprep.subr.mxu0 0.0
    %1756 = vmatpush1.msra.mxu0 0.0
    %1757 = vmatprep.subr.mxu0 0.0
    %1758 = vmatpush1.msra.mxu0 0.0
    %1759 = vmatprep.subr.mxu0 0.0
    %1760 = vmatpush1.msra.mxu0 0.0
    %1761 = vmatprep.mubr.f32.mxu0 0.0
    %1762 = vmatmul.mubr.f32.gmra.mrb[0].mxu0 %v1695
    %v1763 = vpop.f32.mrb[0].mxu0
    %v1764 = vadd.f32 %v201, %v1763
    %v1765 = vpop.f32.mrb[0].mxu0
    %1766 = vdwg.mxu0
    %v1767 = vadd.f32 %v1764, %v1666
    %v1768 = vtanh.pop %v1767
    %v1769 = vmul.f32 %v1768, %v748
    %v1770 = vadd.f32 %v1769, %v749
    %v1771 = vmul.f32 %v1770, %v1553
    %1773 = vrot.lane.b32.xlu0 %v1770, 64
    %v1774 = vpop.permute.xlu0 %1773
    %v1776 = vmul.f32 %v1770, %v1774
    %1778 = vrot.lane.b32.xlu0 %v1776, 32
    %v1779 = vpop.permute.xlu0 %1778
    %v1781 = vadd.f32 %v1771, %v1779
    %v1782 = vtanh.pop %v1781
    %1784 = vrot.lane.b32.xlu0 %v1782, 64
    %v1785 = vpop.permute.xlu0 %1784
    %v1787 = vmul.f32 %v1770, %v1785
    %v1789 = vunpack.c.l.s4 1983009808
    %v1790 = vunpack.c.0.s8 %v1789
    %v1791 = vlaneseq
    %v1792 = vshrl.u32 %v1791, 7
    %v1793 = vsub.s32 %v1790, %v1792
    %v1794 = vrot.slane %v1691, %v1793
    %1795 = vrot.lane.b32.xlu0 %v1794, 32
    %v1796 = vpop.permute.xlu0 %1795
    %1798 = vst.msk [vmem:[#allocation2] sm:$0x3] %vm877, %v1796
    %v1801 = vunpack.c.l.s4 1983009808
    %v1802 = vunpack.c.0.s8 %v1801
    %v1803 = vlaneseq
    %v1804 = vshrl.u32 %v1803, 7
    %v1805 = vsub.s32 %v1802, %v1804
    %v1806 = vrot.slane %v1787, %v1805
    %1807 = vrot.lane.b32.xlu0 %v1806, 32
    %v1808 = vpop.permute.xlu0 %1807
    %1810 = vst.msk [vmem:[#allocation2 + $0x2] sm:$0x3] %vm877, %v1808
    %v1811 = vld [vmem:[#allocation2] sm:$0xf]
    %v1814 = vunpack.c.l.s4 1983009808
    %v1815 = vunpack.c.0.s8 %v1814
    %v1816 = vlaneseq
    %v1817 = vshrl.u32 %v1816, 7
    %v1818 = vsub.s32 %v1815, %v1817
    %v1819 = vrot.slane %v1811, %v1818
    %v1820 = vcombine.high %v1819, %v1819
    %1823 = vmatprep.subr.mxu0 %v129
    %1824 = vmatpush1.msra.mxu0 %v128
    %1825 = vmatprep.subr.mxu0 %v131
    %1826 = vmatpush1.msra.mxu0 %v130
    %1827 = vmatprep.subr.mxu0 %v133
    %1828 = vmatpush1.msra.mxu0 %v132
    %1829 = vmatprep.subr.mxu0 %v135
    %1830 = vmatpush1.msra.mxu0 %v134
    %1831 = vmatprep.subr.mxu0 %v137
    %1832 = vmatpush1.msra.mxu0 %v136
    %1833 = vmatprep.subr.mxu0 %v139
    %1834 = vmatpush1.msra.mxu0 %v138
    %1835 = vmatprep.subr.mxu0 %v141
    %1836 = vmatpush1.msra.mxu0 %v140
    %1837 = vmatprep.subr.mxu0 %v143
    %1838 = vmatpush1.msra.mxu0 %v142
    %1839 = vmatprep.subr.mxu0 %v145
    %1840 = vmatpush1.msra.mxu0 %v144
    %1841 = vmatprep.subr.mxu0 %v147
    %1842 = vmatpush1.msra.mxu0 %v146
    %1843 = vmatprep.subr.mxu0 %v149
    %1844 = vmatpush1.msra.mxu0 %v148
    %1845 = vmatprep.subr.mxu0 %v151
    %1846 = vmatpush1.msra.mxu0 %v150
    %1847 = vmatprep.subr.mxu0 %v153
    %1848 = vmatpush1.msra.mxu0 %v152
    %1849 = vmatprep.subr.mxu0 %v155
    %1850 = vmatpush1.msra.mxu0 %v154
    %1851 = vmatprep.subr.mxu0 %v157
    %1852 = vmatpush1.msra.mxu0 %v156
    %1853 = vmatprep.subr.mxu0 %v159
    %1854 = vmatpush1.msra.mxu0 %v158
    %1855 = vmatprep.subr.mxu0 %v161
    %1856 = vmatpush1.msra.mxu0 %v160
    %1857 = vmatprep.subr.mxu0 %v163
    %1858 = vmatpush1.msra.mxu0 %v162
    %1859 = vmatprep.subr.mxu0 %v165
    %1860 = vmatpush1.msra.mxu0 %v164
    %1861 = vmatprep.subr.mxu0 %v167
    %1862 = vmatpush1.msra.mxu0 %v166
    %1863 = vmatprep.subr.mxu0 %v169
    %1864 = vmatpush1.msra.mxu0 %v168
    %1865 = vmatprep.subr.mxu0 %v171
    %1866 = vmatpush1.msra.mxu0 %v170
    %1867 = vmatprep.subr.mxu0 %v173
    %1868 = vmatpush1.msra.mxu0 %v172
    %1869 = vmatprep.subr.mxu0 %v175
    %1870 = vmatpush1.msra.mxu0 %v174
    %1871 = vmatprep.subr.mxu0 %v177
    %1872 = vmatpush1.msra.mxu0 %v176
    %1873 = vmatprep.subr.mxu0 %v179
    %1874 = vmatpush1.msra.mxu0 %v178
    %1875 = vmatprep.subr.mxu0 %v181
    %1876 = vmatpush1.msra.mxu0 %v180
    %1877 = vmatprep.subr.mxu0 %v183
    %1878 = vmatpush1.msra.mxu0 %v182
    %1879 = vmatprep.subr.mxu0 %v185
    %1880 = vmatpush1.msra.mxu0 %v184
    %1881 = vmatprep.subr.mxu0 %v187
    %1882 = vmatpush1.msra.mxu0 %v186
    %1883 = vmatprep.subr.mxu0 %v189
    %1884 = vmatpush1.msra.mxu0 %v188
    %1885 = vmatprep.subr.mxu0 %v191
    %1886 = vmatpush1.msra.mxu0 %v190
    %1887 = vmatprep.mubr.f32.mxu0 %v1820
    %1888 = vmatmul.mubr.f32.gmra.mrb[0].mxu0 %v1819
    %v1889 = vpop.f32.mrb[0].mxu0
    %v1890 = vadd.f32 0.0, %v1889
    %v1891 = vpop.f32.mrb[0].mxu0
    %v1892 = vadd.f32 0.0, %v1891
    %1893 = vdwg.mxu0
    %v1895 = vrot.slane %v1890, 6
    %v1897 = vadd.f32 %v740, %v1895
    %v1898 = vtanh.pop %v1897
    %v1899 = vmul.f32 %v1898, %v748
    %v1900 = vadd.f32 %v1899, %v749
    %v1902 = vrot.slane %v1685, 6
    %v1904 = vmul.f32 %v1900, %v1902
    %1906 = vrot.lane.b32.xlu0 %v1900, 64
    %v1907 = vpop.permute.xlu0 %1906
    %v1909 = vmul.f32 %v1900, %v1907
    %1911 = vrot.lane.b32.xlu0 %v1909, 32
    %v1912 = vpop.permute.xlu0 %1911
    %v1914 = vadd.f32 %v1904, %v1912
    %v1915 = vtanh.pop %v1914
    %1917 = vrot.lane.b32.xlu0 %v1915, 64
    %v1918 = vpop.permute.xlu0 %1917
    %v1920 = vmul.f32 %v1900, %v1918
    %v1922 = vrot.slane %v1920, 2
    %1923 = vrot.lane.b32.xlu0 %v1922, 32
    %v1924 = vpop.permute.xlu0 %1923
    %v1925 = vsel %vm774, %v1924, 0
    %1927 = vmatprep.subr.mxu0 0.0
    %1928 = vmatpush1.msra.mxu0 %v192
    %1929 = vmatprep.subr.mxu0 0.0
    %1930 = vmatpush1.msra.mxu0 %v193
    %1931 = vmatprep.subr.mxu0 0.0
    %1932 = vmatpush1.msra.mxu0 %v194
    %1933 = vmatprep.subr.mxu0 0.0
    %1934 = vmatpush1.msra.mxu0 %v195
    %1935 = vmatprep.subr.mxu0 0.0
    %1936 = vmatpush1.msra.mxu0 0.0
    %1937 = vmatprep.subr.mxu0 0.0
    %1938 = vmatpush1.msra.mxu0 0.0
    %1939 = vmatprep.subr.mxu0 0.0
    %1940 = vmatpush1.msra.mxu0 0.0
    %1941 = vmatprep.subr.mxu0 0.0
    %1942 = vmatpush1.msra.mxu0 0.0
    %1943 = vmatprep.subr.mxu0 0.0
    %1944 = vmatpush1.msra.mxu0 0.0
    %1945 = vmatprep.subr.mxu0 0.0
    %1946 = vmatpush1.msra.mxu0 0.0
    %1947 = vmatprep.subr.mxu0 0.0
    %1948 = vmatpush1.msra.mxu0 0.0
    %1949 = vmatprep.subr.mxu0 0.0
    %1950 = vmatpush1.msra.mxu0 0.0
    %1951 = vmatprep.subr.mxu0 0.0
    %1952 = vmatpush1.msra.mxu0 0.0
    %1953 = vmatprep.subr.mxu0 0.0
    %1954 = vmatpush1.msra.mxu0 0.0
    %1955 = vmatprep.subr.mxu0 0.0
    %1956 = vmatpush1.msra.mxu0 0.0
    %1957 = vmatprep.subr.mxu0 0.0
    %1958 = vmatpush1.msra.mxu0 0.0
    %1959 = vmatprep.subr.mxu0 0.0
    %1960 = vmatpush1.msra.mxu0 0.0
    %1961 = vmatprep.subr.mxu0 0.0
    %1962 = vmatpush1.msra.mxu0 0.0
    %1963 = vmatprep.subr.mxu0 0.0
    %1964 = vmatpush1.msra.mxu0 0.0
    %1965 = vmatprep.subr.mxu0 0.0
    %1966 = vmatpush1.msra.mxu0 0.0
    %1967 = vmatprep.subr.mxu0 0.0
    %1968 = vmatpush1.msra.mxu0 0.0
    %1969 = vmatprep.subr.mxu0 0.0
    %1970 = vmatpush1.msra.mxu0 0.0
    %1971 = vmatprep.subr.mxu0 0.0
    %1972 = vmatpush1.msra.mxu0 0.0
    %1973 = vmatprep.subr.mxu0 0.0
    %1974 = vmatpush1.msra.mxu0 0.0
    %1975 = vmatprep.subr.mxu0 0.0
    %1976 = vmatpush1.msra.mxu0 0.0
    %1977 = vmatprep.subr.mxu0 0.0
    %1978 = vmatpush1.msra.mxu0 0.0
    %1979 = vmatprep.subr.mxu0 0.0
    %1980 = vmatpush1.msra.mxu0 0.0
    %1981 = vmatprep.subr.mxu0 0.0
    %1982 = vmatpush1.msra.mxu0 0.0
    %1983 = vmatprep.subr.mxu0 0.0
    %1984 = vmatpush1.msra.mxu0 0.0
    %1985 = vmatprep.subr.mxu0 0.0
    %1986 = vmatpush1.msra.mxu0 0.0
    %1987 = vmatprep.subr.mxu0 0.0
    %1988 = vmatpush1.msra.mxu0 0.0
    %1989 = vmatprep.subr.mxu0 0.0
    %1990 = vmatpush1.msra.mxu0 0.0
    %1991 = vmatprep.mubr.f32.mxu0 0.0
    %1992 = vmatmul.mubr.f32.gmra.mrb[0].mxu0 %v1925
    %v1993 = vpop.f32.mrb[0].mxu0
    %v1994 = vadd.f32 %v201, %v1993
    %v1995 = vpop.f32.mrb[0].mxu0
    %1996 = vdwg.mxu0
    %v1997 = vadd.f32 %v1994, %v1892
    %v1998 = vtanh.pop %v1997
    %v1999 = vmul.f32 %v1998, %v748
    %v2000 = vadd.f32 %v1999, %v749
    %v2001 = vmul.f32 %v2000, %v1781
    %2003 = vrot.lane.b32.xlu0 %v2000, 64
    %v2004 = vpop.permute.xlu0 %2003
    %v2006 = vmul.f32 %v2000, %v2004
    %2008 = vrot.lane.b32.xlu0 %v2006, 32
    %v2009 = vpop.permute.xlu0 %2008
    %v2011 = vadd.f32 %v2001, %v2009
    %v2012 = vtanh.pop %v2011
    %2014 = vrot.lane.b32.xlu0 %v2012, 64
    %v2015 = vpop.permute.xlu0 %2014
    %v2017 = vmul.f32 %v2000, %v2015
    %v2019 = vunpack.c.l.s4 1983009808
    %v2020 = vunpack.c.0.s8 %v2019
    %v2021 = vlaneseq
    %v2022 = vshrl.u32 %v2021, 7
    %v2023 = vsub.s32 %v2020, %v2022
    %v2024 = vrot.slane %v1920, %v2023
    %v2025 = vcombine.high %v2024, %v2024
    %2026 = vrot.lane.b32.xlu0 %v2025, 32
    %v2027 = vpop.permute.xlu0 %2026
    %2029 = vst.msk [vmem:[#allocation2] sm:$0x3] %vm877, %v2027
    %v2032 = vunpack.c.l.s4 1983009808
    %v2033 = vunpack.c.0.s8 %v2032
    %v2034 = vlaneseq
    %v2035 = vshrl.u32 %v2034, 7
    %v2036 = vsub.s32 %v2033, %v2035
    %v2037 = vrot.slane %v2017, %v2036
    %2038 = vrot.lane.b32.xlu0 %v2037, 32
    %v2039 = vpop.permute.xlu0 %2038
    %2041 = vst.msk [vmem:[#allocation2 + $0x2] sm:$0x3] %vm877, %v2039
    %v2042 = vld [vmem:[#allocation2] sm:$0xf]
    %v2045 = vunpack.c.l.s4 1983009808
    %v2046 = vunpack.c.0.s8 %v2045
    %v2047 = vlaneseq
    %v2048 = vshrl.u32 %v2047, 7
    %v2049 = vsub.s32 %v2046, %v2048
    %v2050 = vrot.slane %v2042, %v2049
    %v2051 = vcombine.high %v2050, %v2050
    %2054 = vmatprep.subr.mxu0 %v129
    %2055 = vmatpush1.msra.mxu0 %v128
    %2056 = vmatprep.subr.mxu0 %v131
    %2057 = vmatpush1.msra.mxu0 %v130
    %2058 = vmatprep.subr.mxu0 %v133
    %2059 = vmatpush1.msra.mxu0 %v132
    %2060 = vmatprep.subr.mxu0 %v135
    %2061 = vmatpush1.msra.mxu0 %v134
    %2062 = vmatprep.subr.mxu0 %v137
    %2063 = vmatpush1.msra.mxu0 %v136
    %2064 = vmatprep.subr.mxu0 %v139
    %2065 = vmatpush1.msra.mxu0 %v138
    %2066 = vmatprep.subr.mxu0 %v141
    %2067 = vmatpush1.msra.mxu0 %v140
    %2068 = vmatprep.subr.mxu0 %v143
    %2069 = vmatpush1.msra.mxu0 %v142
    %2070 = vmatprep.subr.mxu0 %v145
    %2071 = vmatpush1.msra.mxu0 %v144
    %2072 = vmatprep.subr.mxu0 %v147
    %2073 = vmatpush1.msra.mxu0 %v146
    %2074 = vmatprep.subr.mxu0 %v149
    %2075 = vmatpush1.msra.mxu0 %v148
    %2076 = vmatprep.subr.mxu0 %v151
    %2077 = vmatpush1.msra.mxu0 %v150
    %2078 = vmatprep.subr.mxu0 %v153
    %2079 = vmatpush1.msra.mxu0 %v152
    %2080 = vmatprep.subr.mxu0 %v155
    %2081 = vmatpush1.msra.mxu0 %v154
    %2082 = vmatprep.subr.mxu0 %v157
    %2083 = vmatpush1.msra.mxu0 %v156
    %2084 = vmatprep.subr.mxu0 %v159
    %2085 = vmatpush1.msra.mxu0 %v158
    %2086 = vmatprep.subr.mxu0 %v161
    %2087 = vmatpush1.msra.mxu0 %v160
    %2088 = vmatprep.subr.mxu0 %v163
    %2089 = vmatpush1.msra.mxu0 %v162
    %2090 = vmatprep.subr.mxu0 %v165
    %2091 = vmatpush1.msra.mxu0 %v164
    %2092 = vmatprep.subr.mxu0 %v167
    %2093 = vmatpush1.msra.mxu0 %v166
    %2094 = vmatprep.subr.mxu0 %v169
    %2095 = vmatpush1.msra.mxu0 %v168
    %2096 = vmatprep.subr.mxu0 %v171
    %2097 = vmatpush1.msra.mxu0 %v170
    %2098 = vmatprep.subr.mxu0 %v173
    %2099 = vmatpush1.msra.mxu0 %v172
    %2100 = vmatprep.subr.mxu0 %v175
    %2101 = vmatpush1.msra.mxu0 %v174
    %2102 = vmatprep.subr.mxu0 %v177
    %2103 = vmatpush1.msra.mxu0 %v176
    %2104 = vmatprep.subr.mxu0 %v179
    %2105 = vmatpush1.msra.mxu0 %v178
    %2106 = vmatprep.subr.mxu0 %v181
    %2107 = vmatpush1.msra.mxu0 %v180
    %2108 = vmatprep.subr.mxu0 %v183
    %2109 = vmatpush1.msra.mxu0 %v182
    %2110 = vmatprep.subr.mxu0 %v185
    %2111 = vmatpush1.msra.mxu0 %v184
    %2112 = vmatprep.subr.mxu0 %v187
    %2113 = vmatpush1.msra.mxu0 %v186
    %2114 = vmatprep.subr.mxu0 %v189
    %2115 = vmatpush1.msra.mxu0 %v188
    %2116 = vmatprep.subr.mxu0 %v191
    %2117 = vmatpush1.msra.mxu0 %v190
    %2118 = vmatprep.mubr.f32.mxu0 %v2051
    %2119 = vmatmul.mubr.f32.gmra.mrb[0].mxu0 %v2050
    %v2120 = vpop.f32.mrb[0].mxu0
    %v2121 = vadd.f32 0.0, %v2120
    %v2122 = vpop.f32.mrb[0].mxu0
    %v2123 = vadd.f32 0.0, %v2122
    %2124 = vdwg.mxu0
    %v2126 = vrot.slane %v2121, 4
    %v2128 = vadd.f32 %v740, %v2126
    %v2129 = vtanh.pop %v2128
    %v2130 = vmul.f32 %v2129, %v748
    %v2131 = vadd.f32 %v2130, %v749
    %v2133 = vrot.slane %v1914, 6
    %v2135 = vmul.f32 %v2131, %v2133
    %2137 = vrot.lane.b32.xlu0 %v2131, 64
    %v2138 = vpop.permute.xlu0 %2137
    %v2140 = vmul.f32 %v2131, %v2138
    %2142 = vrot.lane.b32.xlu0 %v2140, 32
    %v2143 = vpop.permute.xlu0 %2142
    %v2145 = vadd.f32 %v2135, %v2143
    %v2146 = vtanh.pop %v2145
    %2148 = vrot.lane.b32.xlu0 %v2146, 64
    %v2149 = vpop.permute.xlu0 %2148
    %v2151 = vmul.f32 %v2131, %v2149
    %v2153 = vrot.slane %v2151, 4
    %2154 = vrot.lane.b32.xlu0 %v2153, 32
    %v2155 = vpop.permute.xlu0 %2154
    %v2156 = vsel %vm774, %v2155, 0
    %2158 = vmatprep.subr.mxu0 0.0
    %2159 = vmatpush1.msra.mxu0 %v192
    %2160 = vmatprep.subr.mxu0 0.0
    %2161 = vmatpush1.msra.mxu0 %v193
    %2162 = vmatprep.subr.mxu0 0.0
    %2163 = vmatpush1.msra.mxu0 %v194
    %2164 = vmatprep.subr.mxu0 0.0
    %2165 = vmatpush1.msra.mxu0 %v195
    %2166 = vmatprep.subr.mxu0 0.0
    %2167 = vmatpush1.msra.mxu0 0.0
    %2168 = vmatprep.subr.mxu0 0.0
    %2169 = vmatpush1.msra.mxu0 0.0
    %2170 = vmatprep.subr.mxu0 0.0
    %2171 = vmatpush1.msra.mxu0 0.0
    %2172 = vmatprep.subr.mxu0 0.0
    %2173 = vmatpush1.msra.mxu0 0.0
    %2174 = vmatprep.subr.mxu0 0.0
    %2175 = vmatpush1.msra.mxu0 0.0
    %2176 = vmatprep.subr.mxu0 0.0
    %2177 = vmatpush1.msra.mxu0 0.0
    %2178 = vmatprep.subr.mxu0 0.0
    %2179 = vmatpush1.msra.mxu0 0.0
    %2180 = vmatprep.subr.mxu0 0.0
    %2181 = vmatpush1.msra.mxu0 0.0
    %2182 = vmatprep.subr.mxu0 0.0
    %2183 = vmatpush1.msra.mxu0 0.0
    %2184 = vmatprep.subr.mxu0 0.0
    %2185 = vmatpush1.msra.mxu0 0.0
    %2186 = vmatprep.subr.mxu0 0.0
    %2187 = vmatpush1.msra.mxu0 0.0
    %2188 = vmatprep.subr.mxu0 0.0
    %2189 = vmatpush1.msra.mxu0 0.0
    %2190 = vmatprep.subr.mxu0 0.0
    %2191 = vmatpush1.msra.mxu0 0.0
    %2192 = vmatprep.subr.mxu0 0.0
    %2193 = vmatpush1.msra.mxu0 0.0
    %2194 = vmatprep.subr.mxu0 0.0
    %2195 = vmatpush1.msra.mxu0 0.0
    %2196 = vmatprep.subr.mxu0 0.0
    %2197 = vmatpush1.msra.mxu0 0.0
    %2198 = vmatprep.subr.mxu0 0.0
    %2199 = vmatpush1.msra.mxu0 0.0
    %2200 = vmatprep.subr.mxu0 0.0
    %2201 = vmatpush1.msra.mxu0 0.0
    %2202 = vmatprep.subr.mxu0 0.0
    %2203 = vmatpush1.msra.mxu0 0.0
    %2204 = vmatprep.subr.mxu0 0.0
    %2205 = vmatpush1.msra.mxu0 0.0
    %2206 = vmatprep.subr.mxu0 0.0
    %2207 = vmatpush1.msra.mxu0 0.0
    %2208 = vmatprep.subr.mxu0 0.0
    %2209 = vmatpush1.msra.mxu0 0.0
    %2210 = vmatprep.subr.mxu0 0.0
    %2211 = vmatpush1.msra.mxu0 0.0
    %2212 = vmatprep.subr.mxu0 0.0
    %2213 = vmatpush1.msra.mxu0 0.0
    %2214 = vmatprep.subr.mxu0 0.0
    %2215 = vmatpush1.msra.mxu0 0.0
    %2216 = vmatprep.subr.mxu0 0.0
    %2217 = vmatpush1.msra.mxu0 0.0
    %2218 = vmatprep.subr.mxu0 0.0
    %2219 = vmatpush1.msra.mxu0 0.0
    %2220 = vmatprep.subr.mxu0 0.0
    %2221 = vmatpush1.msra.mxu0 0.0
    %2222 = vmatprep.mubr.f32.mxu0 0.0
    %2223 = vmatmul.mubr.f32.gmra.mrb[0].mxu0 %v2156
    %v2224 = vpop.f32.mrb[0].mxu0
    %v2225 = vadd.f32 %v201, %v2224
    %v2226 = vpop.f32.mrb[0].mxu0
    %2227 = vdwg.mxu0
    %v2228 = vadd.f32 %v2225, %v2123
    %v2229 = vtanh.pop %v2228
    %v2230 = vmul.f32 %v2229, %v748
    %v2231 = vadd.f32 %v2230, %v749
    %v2232 = vmul.f32 %v2231, %v2011
    %2234 = vrot.lane.b32.xlu0 %v2231, 64
    %v2235 = vpop.permute.xlu0 %2234
    %v2237 = vmul.f32 %v2231, %v2235
    %2239 = vrot.lane.b32.xlu0 %v2237, 32
    %v2240 = vpop.permute.xlu0 %2239
    %v2242 = vadd.f32 %v2232, %v2240
    %v2243 = vtanh.pop %v2242
    %2245 = vrot.lane.b32.xlu0 %v2243, 64
    %v2246 = vpop.permute.xlu0 %2245
    %v2248 = vmul.f32 %v2231, %v2246
    %v2249 = vcombine.high %v2151, %v2151
    %v2251 = vunpack.c.l.s4 1983009808
    %v2252 = vunpack.c.0.s8 %v2251
    %v2253 = vlaneseq
    %v2254 = vshrl.u32 %v2253, 7
    %v2255 = vsub.s32 %v2252, %v2254
    %v2256 = vrot.slane %v2249, %v2255
    %2257 = vrot.lane.b32.xlu0 %v2256, 32
    %v2258 = vpop.permute.xlu0 %2257
    %2260 = vst.msk [vmem:[#allocation2] sm:$0x3] %vm877, %v2258
    %v2263 = vunpack.c.l.s4 1983009808
    %v2264 = vunpack.c.0.s8 %v2263
    %v2265 = vlaneseq
    %v2266 = vshrl.u32 %v2265, 7
    %v2267 = vsub.s32 %v2264, %v2266
    %v2268 = vrot.slane %v2248, %v2267
    %2269 = vrot.lane.b32.xlu0 %v2268, 32
    %v2270 = vpop.permute.xlu0 %2269
    %2272 = vst.msk [vmem:[#allocation2 + $0x2] sm:$0x3] %vm877, %v2270
    %v2273 = vld [vmem:[#allocation2] sm:$0xf]
    %v2276 = vunpack.c.l.s4 1983009808
    %v2277 = vunpack.c.0.s8 %v2276
    %v2278 = vlaneseq
    %v2279 = vshrl.u32 %v2278, 7
    %v2280 = vsub.s32 %v2277, %v2279
    %v2281 = vrot.slane %v2273, %v2280
    %v2282 = vcombine.high %v2281, %v2281
    %2285 = vmatprep.subr.mxu0 %v129
    %2286 = vmatpush1.msra.mxu0 %v128
    %2287 = vmatprep.subr.mxu0 %v131
    %2288 = vmatpush1.msra.mxu0 %v130
    %2289 = vmatprep.subr.mxu0 %v133
    %2290 = vmatpush1.msra.mxu0 %v132
    %2291 = vmatprep.subr.mxu0 %v135
    %2292 = vmatpush1.msra.mxu0 %v134
    %2293 = vmatprep.subr.mxu0 %v137
    %2294 = vmatpush1.msra.mxu0 %v136
    %2295 = vmatprep.subr.mxu0 %v139
    %2296 = vmatpush1.msra.mxu0 %v138
    %2297 = vmatprep.subr.mxu0 %v141
    %2298 = vmatpush1.msra.mxu0 %v140
    %2299 = vmatprep.subr.mxu0 %v143
    %2300 = vmatpush1.msra.mxu0 %v142
    %2301 = vmatprep.subr.mxu0 %v145
    %2302 = vmatpush1.msra.mxu0 %v144
    %2303 = vmatprep.subr.mxu0 %v147
    %2304 = vmatpush1.msra.mxu0 %v146
    %2305 = vmatprep.subr.mxu0 %v149
    %2306 = vmatpush1.msra.mxu0 %v148
    %2307 = vmatprep.subr.mxu0 %v151
    %2308 = vmatpush1.msra.mxu0 %v150
    %2309 = vmatprep.subr.mxu0 %v153
    %2310 = vmatpush1.msra.mxu0 %v152
    %2311 = vmatprep.subr.mxu0 %v155
    %2312 = vmatpush1.msra.mxu0 %v154
    %2313 = vmatprep.subr.mxu0 %v157
    %2314 = vmatpush1.msra.mxu0 %v156
    %2315 = vmatprep.subr.mxu0 %v159
    %2316 = vmatpush1.msra.mxu0 %v158
    %2317 = vmatprep.subr.mxu0 %v161
    %2318 = vmatpush1.msra.mxu0 %v160
    %2319 = vmatprep.subr.mxu0 %v163
    %2320 = vmatpush1.msra.mxu0 %v162
    %2321 = vmatprep.subr.mxu0 %v165
    %2322 = vmatpush1.msra.mxu0 %v164
    %2323 = vmatprep.subr.mxu0 %v167
    %2324 = vmatpush1.msra.mxu0 %v166
    %2325 = vmatprep.subr.mxu0 %v169
    %2326 = vmatpush1.msra.mxu0 %v168
    %2327 = vmatprep.subr.mxu0 %v171
    %2328 = vmatpush1.msra.mxu0 %v170
    %2329 = vmatprep.subr.mxu0 %v173
    %2330 = vmatpush1.msra.mxu0 %v172
    %2331 = vmatprep.subr.mxu0 %v175
    %2332 = vmatpush1.msra.mxu0 %v174
    %2333 = vmatprep.subr.mxu0 %v177
    %2334 = vmatpush1.msra.mxu0 %v176
    %2335 = vmatprep.subr.mxu0 %v179
    %2336 = vmatpush1.msra.mxu0 %v178
    %2337 = vmatprep.subr.mxu0 %v181
    %2338 = vmatpush1.msra.mxu0 %v180
    %2339 = vmatprep.subr.mxu0 %v183
    %2340 = vmatpush1.msra.mxu0 %v182
    %2341 = vmatprep.subr.mxu0 %v185
    %2342 = vmatpush1.msra.mxu0 %v184
    %2343 = vmatprep.subr.mxu0 %v187
    %2344 = vmatpush1.msra.mxu0 %v186
    %2345 = vmatprep.subr.mxu0 %v189
    %2346 = vmatpush1.msra.mxu0 %v188
    %2347 = vmatprep.subr.mxu0 %v191
    %2348 = vmatpush1.msra.mxu0 %v190
    %2349 = vmatprep.mubr.f32.mxu0 %v2282
    %2350 = vmatmul.mubr.f32.gmra.mrb[0].mxu0 %v2281
    %v2351 = vpop.f32.mrb[0].mxu0
    %v2352 = vadd.f32 0.0, %v2351
    %v2353 = vpop.f32.mrb[0].mxu0
    %v2354 = vadd.f32 0.0, %v2353
    %2355 = vdwg.mxu0
    %v2357 = vrot.slane %v2352, 2
    %v2359 = vadd.f32 %v740, %v2357
    %v2360 = vtanh.pop %v2359
    %v2361 = vmul.f32 %v2360, %v748
    %v2362 = vadd.f32 %v2361, %v749
    %v2364 = vrot.slane %v2145, 6
    %v2366 = vmul.f32 %v2362, %v2364
    %2368 = vrot.lane.b32.xlu0 %v2362, 64
    %v2369 = vpop.permute.xlu0 %2368
    %v2371 = vmul.f32 %v2362, %v2369
    %2373 = vrot.lane.b32.xlu0 %v2371, 32
    %v2374 = vpop.permute.xlu0 %2373
    %v2376 = vadd.f32 %v2366, %v2374
    %v2377 = vtanh.pop %v2376
    %2379 = vrot.lane.b32.xlu0 %v2377, 64
    %v2380 = vpop.permute.xlu0 %2379
    %v2382 = vmul.f32 %v2362, %v2380
    %v2384 = vrot.slane %v2382, 6
    %2385 = vrot.lane.b32.xlu0 %v2384, 32
    %v2386 = vpop.permute.xlu0 %2385
    %v2387 = vsel %vm774, %v2386, 0
    %2389 = vmatprep.subr.mxu0 0.0
    %2390 = vmatpush1.msra.mxu0 %v192
    %2391 = vmatprep.subr.mxu0 0.0
    %2392 = vmatpush1.msra.mxu0 %v193
    %2393 = vmatprep.subr.mxu0 0.0
    %2394 = vmatpush1.msra.mxu0 %v194
    %2395 = vmatprep.subr.mxu0 0.0
    %2396 = vmatpush1.msra.mxu0 %v195
    %2397 = vmatprep.subr.mxu0 0.0
    %2398 = vmatpush1.msra.mxu0 0.0
    %2399 = vmatprep.subr.mxu0 0.0
    %2400 = vmatpush1.msra.mxu0 0.0
    %2401 = vmatprep.subr.mxu0 0.0
    %2402 = vmatpush1.msra.mxu0 0.0
    %2403 = vmatprep.subr.mxu0 0.0
    %2404 = vmatpush1.msra.mxu0 0.0
    %2405 = vmatprep.subr.mxu0 0.0
    %2406 = vmatpush1.msra.mxu0 0.0
    %2407 = vmatprep.subr.mxu0 0.0
    %2408 = vmatpush1.msra.mxu0 0.0
    %2409 = vmatprep.subr.mxu0 0.0
    %2410 = vmatpush1.msra.mxu0 0.0
    %2411 = vmatprep.subr.mxu0 0.0
    %2412 = vmatpush1.msra.mxu0 0.0
    %2413 = vmatprep.subr.mxu0 0.0
    %2414 = vmatpush1.msra.mxu0 0.0
    %2415 = vmatprep.subr.mxu0 0.0
    %2416 = vmatpush1.msra.mxu0 0.0
    %2417 = vmatprep.subr.mxu0 0.0
    %2418 = vmatpush1.msra.mxu0 0.0
    %2419 = vmatprep.subr.mxu0 0.0
    %2420 = vmatpush1.msra.mxu0 0.0
    %2421 = vmatprep.subr.mxu0 0.0
    %2422 = vmatpush1.msra.mxu0 0.0
    %2423 = vmatprep.subr.mxu0 0.0
    %2424 = vmatpush1.msra.mxu0 0.0
    %2425 = vmatprep.subr.mxu0 0.0
    %2426 = vmatpush1.msra.mxu0 0.0
    %2427 = vmatprep.subr.mxu0 0.0
    %2428 = vmatpush1.msra.mxu0 0.0
    %2429 = vmatprep.subr.mxu0 0.0
    %2430 = vmatpush1.msra.mxu0 0.0
    %2431 = vmatprep.subr.mxu0 0.0
    %2432 = vmatpush1.msra.mxu0 0.0
    %2433 = vmatprep.subr.mxu0 0.0
    %2434 = vmatpush1.msra.mxu0 0.0
    %2435 = vmatprep.subr.mxu0 0.0
    %2436 = vmatpush1.msra.mxu0 0.0
    %2437 = vmatprep.subr.mxu0 0.0
    %2438 = vmatpush1.msra.mxu0 0.0
    %2439 = vmatprep.subr.mxu0 0.0
    %2440 = vmatpush1.msra.mxu0 0.0
    %2441 = vmatprep.subr.mxu0 0.0
    %2442 = vmatpush1.msra.mxu0 0.0
    %2443 = vmatprep.subr.mxu0 0.0
    %2444 = vmatpush1.msra.mxu0 0.0
    %2445 = vmatprep.subr.mxu0 0.0
    %2446 = vmatpush1.msra.mxu0 0.0
    %2447 = vmatprep.subr.mxu0 0.0
    %2448 = vmatpush1.msra.mxu0 0.0
    %2449 = vmatprep.subr.mxu0 0.0
    %2450 = vmatpush1.msra.mxu0 0.0
    %2451 = vmatprep.subr.mxu0 0.0
    %2452 = vmatpush1.msra.mxu0 0.0
    %2453 = vmatprep.mubr.f32.mxu0 0.0
    %2454 = vmatmul.mubr.f32.gmra.mrb[0].mxu0 %v2387
    %v2455 = vpop.f32.mrb[0].mxu0
    %v2456 = vadd.f32 %v201, %v2455
    %v2457 = vpop.f32.mrb[0].mxu0
    %2458 = vdwg.mxu0
    %v2459 = vadd.f32 %v2456, %v2354
    %v2460 = vtanh.pop %v2459
    %v2461 = vmul.f32 %v2460, %v748
    %v2462 = vadd.f32 %v2461, %v749
    %v2463 = vmul.f32 %v2462, %v2242
    %2465 = vrot.lane.b32.xlu0 %v2462, 64
    %v2466 = vpop.permute.xlu0 %2465
    %v2468 = vmul.f32 %v2462, %v2466
    %2470 = vrot.lane.b32.xlu0 %v2468, 32
    %v2471 = vpop.permute.xlu0 %2470
    %v2473 = vadd.f32 %v2463, %v2471
    %v2474 = vtanh.pop %v2473
    %2476 = vrot.lane.b32.xlu0 %v2474, 64
    %v2477 = vpop.permute.xlu0 %2476
    %v2479 = vmul.f32 %v2462, %v2477
    %2481 = vrot.lane.b32.xlu0 %v2479, 32
    %v2482 = vpop.permute.xlu0 %2481
    %v2483 = vsel %vm774, %v2482, 0
    %2485 = vmatprep.subr.mxu0 0.0
    %2486 = vmatpush1.msra.mxu0 %v196
    %2487 = vmatprep.subr.mxu0 0.0
    %2488 = vmatpush1.msra.mxu0 %v197
    %2489 = vmatprep.subr.mxu0 0.0
    %2490 = vmatpush1.msra.mxu0 %v198
    %2491 = vmatprep.subr.mxu0 0.0
    %2492 = vmatpush1.msra.mxu0 %v199
    %2493 = vmatprep.subr.mxu0 0.0
    %2494 = vmatpush1.msra.mxu0 0.0
    %2495 = vmatprep.subr.mxu0 0.0
    %2496 = vmatpush1.msra.mxu0 0.0
    %2497 = vmatprep.subr.mxu0 0.0
    %2498 = vmatpush1.msra.mxu0 0.0
    %2499 = vmatprep.subr.mxu0 0.0
    %2500 = vmatpush1.msra.mxu0 0.0
    %2501 = vmatprep.subr.mxu0 0.0
    %2502 = vmatpush1.msra.mxu0 0.0
    %2503 = vmatprep.subr.mxu0 0.0
    %2504 = vmatpush1.msra.mxu0 0.0
    %2505 = vmatprep.subr.mxu0 0.0
    %2506 = vmatpush1.msra.mxu0 0.0
    %2507 = vmatprep.subr.mxu0 0.0
    %2508 = vmatpush1.msra.mxu0 0.0
    %2509 = vmatprep.subr.mxu0 0.0
    %2510 = vmatpush1.msra.mxu0 0.0
    %2511 = vmatprep.subr.mxu0 0.0
    %2512 = vmatpush1.msra.mxu0 0.0
    %2513 = vmatprep.subr.mxu0 0.0
    %2514 = vmatpush1.msra.mxu0 0.0
    %2515 = vmatprep.subr.mxu0 0.0
    %2516 = vmatpush1.msra.mxu0 0.0
    %2517 = vmatprep.subr.mxu0 0.0
    %2518 = vmatpush1.msra.mxu0 0.0
    %2519 = vmatprep.subr.mxu0 0.0
    %2520 = vmatpush1.msra.mxu0 0.0
    %2521 = vmatprep.subr.mxu0 0.0
    %2522 = vmatpush1.msra.mxu0 0.0
    %2523 = vmatprep.subr.mxu0 0.0
    %2524 = vmatpush1.msra.mxu0 0.0
    %2525 = vmatprep.subr.mxu0 0.0
    %2526 = vmatpush1.msra.mxu0 0.0
    %2527 = vmatprep.subr.mxu0 0.0
    %2528 = vmatpush1.msra.mxu0 0.0
    %2529 = vmatprep.subr.mxu0 0.0
    %2530 = vmatpush1.msra.mxu0 0.0
    %2531 = vmatprep.subr.mxu0 0.0
    %2532 = vmatpush1.msra.mxu0 0.0
    %2533 = vmatprep.subr.mxu0 0.0
    %2534 = vmatpush1.msra.mxu0 0.0
    %2535 = vmatprep.subr.mxu0 0.0
    %2536 = vmatpush1.msra.mxu0 0.0
    %2537 = vmatprep.subr.mxu0 0.0
    %2538 = vmatpush1.msra.mxu0 0.0
    %2539 = vmatprep.subr.mxu0 0.0
    %2540 = vmatpush1.msra.mxu0 0.0
    %2541 = vmatprep.subr.mxu0 0.0
    %2542 = vmatpush1.msra.mxu0 0.0
    %2543 = vmatprep.subr.mxu0 0.0
    %2544 = vmatpush1.msra.mxu0 0.0
    %2545 = vmatprep.subr.mxu0 0.0
    %2546 = vmatpush1.msra.mxu0 0.0
    %2547 = vmatprep.subr.mxu0 0.0
    %2548 = vmatpush1.msra.mxu0 0.0
    %2549 = vmatprep.mubr.f32.mxu0 0.0
    %2550 = vmatmul.mubr.f32.gmra.mrb[0].mxu0 %v2483
    %v2551 = vpop.f32.mrb[0].mxu0
    %v2552 = vadd.f32 %v203, %v2551
    %v2553 = vpop.f32.mrb[0].mxu0
    %2554 = vdwg.mxu0
    %vm2555 = vcmask 25600
    %2556 = vst.msk [vmem:[#allocation3] sm:$0x3] %vm2555, %v2552
    // Predicated region
    $region14: #{cnn_lstm_forward.1} parent=1 // pred_check
      _
    $region15: #{cnn_lstm_forward.1} parent=1 // pred_check_branch
      %2558 = sbr.rel (0) target = $region17
    $region16: #{cnn_lstm_forward.1} parent=1 // pred_region
      %s2560 = ssub.s32 32, 32
      %2561 = vsyncadd [#allocation4], %s2560
      %s2563 = sshll.u32 [#allocation3], 4
      %s2564 = int_to_ptr.vmem [resolvable:$true] %s2563
      %2566 = dma.vmem_to_hbm [thread:$0]  %s2564, 32, %s3, [#allocation4]
    $region17: #{cnn_lstm_forward.1} parent=1 // pred_fallthru
      _
    // Predicated region
    $region18: #{cnn_lstm_forward.1} parent=1 // pred_check
      _
    $region19: #{cnn_lstm_forward.1} parent=1 // pred_check_branch
      %2568 = sbr.rel (0) target = $region21
    $region20: #{cnn_lstm_forward.1} parent=1 // pred_region
      %2569 = dma.done [#allocation4], 32
    $region21: #{cnn_lstm_forward.1} parent=1 // pred_fallthru
      _
    %2570 = vsyncpa [#allocation4], 1

</llo_original>
